<compile_context>
chip_gen: v5e
topology: v5e:2x2
jax: 0.10.0
libtpu: 0.0.40
codegen_flags: <defaults>
</compile_context>

<pallas_src>
import math

import jax
import jax.numpy as jnp
from jax.experimental import pallas as pl
from jax.experimental.pallas import tpu as pltpu

_D_IN = 512
_D_HID = 256
_D_OUT = 4
_N_PAD = 128  # lane-dense padded output width


def _mlp_kernel(x_ref, w1_ref, b1_ref, w2_ref, b2_ref, o_ref):
    # x_ref:  (TB, 512)  bf16
    # w1_ref: (512, 256) bf16     b1_ref: (1, 256) f32
    # w2_ref: (256, 128) bf16     b2_ref: (1, 128) f32 (zero-padded past col 4)
    # o_ref:  (TB, 128)  f32
    x = x_ref[...]
    # fc1 + ReLU (bf16 MXU matmul, f32 accumulate)
    h = jnp.dot(x, w1_ref[...], preferred_element_type=jnp.float32) + b1_ref[...]
    h = jnp.maximum(h, 0.0)
    # fc2 (bf16 MXU matmul into lane-dense padded N=128)
    y = jnp.dot(h.astype(jnp.bfloat16), w2_ref[...],
                preferred_element_type=jnp.float32) + b2_ref[...]
    # exact sigmoid (keep bit-friendly vs. reference; divide cost is negligible)
    o_ref[...] = (1.0 / (1.0 + jnp.exp(-y))).astype(o_ref.dtype)


def keypoint_regressor(x, w1, b1, w2, b2, *, block_b=256):
    """x: (B, 512) float32 -> (B, 4) float32.

    w1: (512, 256), b1: (1, 256), w2: (256, 4), b2: (1, 4)  (PyTorch-transposed).
    """
    B, d_in = x.shape
    d_hid = w1.shape[1]
    d_out = w2.shape[1]
    assert d_in == _D_IN and d_hid == _D_HID and d_out == _D_OUT

    # Ragged batch: cdiv grid + zero-pad x (padded rows sliced off below).
    num_blocks = int(pl.cdiv(B, block_b))
    b_pad = num_blocks * block_b

    # bf16 inputs for the MXU; biases stay f32 for exact add.
    x_bf = x.astype(jnp.bfloat16)
    if b_pad != B:
        x_bf = jnp.pad(x_bf, ((0, b_pad - B), (0, 0)))
    w1_bf = w1.astype(jnp.bfloat16)
    b1_f = b1.astype(jnp.float32)

    # Pad W2/b2 to 128 lanes for a lane-dense output slab.
    w2_p = jnp.zeros((d_hid, _N_PAD), jnp.bfloat16).at[:, :d_out].set(
        w2.astype(jnp.bfloat16))
    b2_p = jnp.zeros((1, _N_PAD), jnp.float32).at[:, :d_out].set(
        b2.astype(jnp.float32))

    grid = (num_blocks,)
    out = pl.pallas_call(
        _mlp_kernel,
        out_shape=jax.ShapeDtypeStruct((b_pad, _N_PAD), jnp.float32),
        grid_spec=pltpu.PrefetchScalarGridSpec(
            num_scalar_prefetch=0,
            grid=grid,
            in_specs=[
                pl.BlockSpec((block_b, d_in), lambda i: (i, 0)),    # x tile
                pl.BlockSpec((d_in, d_hid), lambda i: (0, 0)),      # W1 (grid-invariant)
                pl.BlockSpec((1, d_hid), lambda i: (0, 0)),         # b1
                pl.BlockSpec((d_hid, _N_PAD), lambda i: (0, 0)),    # W2 (padded)
                pl.BlockSpec((1, _N_PAD), lambda i: (0, 0)),        # b2 (padded)
            ],
            out_specs=pl.BlockSpec((block_b, _N_PAD), lambda i: (i, 0)),
        ),
        compiler_params=pltpu.CompilerParams(
            dimension_semantics=("parallel",),
        ),
    )(x_bf, w1_bf, b1_f, w2_p, b2_p)

    return out[:B, :d_out]


def init_params(key):
    """Deterministic init mimicking PyTorch nn.Linear default (U[-1/sqrt(fan_in), +])."""
    k1, k2, k3, k4 = jax.random.split(key, 4)
    bound1 = 1.0 / math.sqrt(_D_IN)
    bound2 = 1.0 / math.sqrt(_D_HID)
    w1 = jax.random.uniform(k1, (_D_IN, _D_HID), jnp.float32, -bound1, bound1)
    b1 = jax.random.uniform(k2, (1, _D_HID), jnp.float32, -bound1, bound1)
    w2 = jax.random.uniform(k3, (_D_HID, _D_OUT), jnp.float32, -bound2, bound2)
    b2 = jax.random.uniform(k4, (1, _D_OUT), jnp.float32, -bound2, bound2)
    return w1, b1, w2, b2


def _ref(x, w1, b1, w2, b2):
    return jax.nn.sigmoid(jnp.maximum(x @ w1 + b1, 0.0) @ w2 + b2)


if __name__ == "__main__":
    key = jax.random.PRNGKey(0)
    kx, kp = jax.random.split(key)
    w1, b1, w2, b2 = init_params(kp)

    # Test 1: ragged small batch, single grid step (default block_b=256).
    B1 = 37
    x1 = jax.random.normal(kx, (B1, _D_IN), jnp.float32)
    out1 = jax.block_until_ready(keypoint_regressor(x1, w1, b1, w2, b2))
    ref1 = _ref(x1, w1, b1, w2, b2)
    assert out1.shape == (B1, _D_OUT)
    # bf16 matmul with f32 accumulation -> loosened tolerance vs f32 reference.
    assert jnp.allclose(out1, ref1, atol=1e-2, rtol=1e-2), float(
        jnp.max(jnp.abs(out1 - ref1)))

    # Test 2: ragged batch spanning multiple grid steps (exercises pipelining /
    # megacore sharding path).
    B2 = 300
    x2 = jax.random.normal(jax.random.fold_in(kx, 1), (B2, _D_IN), jnp.float32)
    out2 = jax.block_until_ready(
        keypoint_regressor(x2, w1, b1, w2, b2, block_b=128))
    ref2 = _ref(x2, w1, b1, w2, b2)
    assert out2.shape == (B2, _D_OUT)
    assert jnp.allclose(out2, ref2, atol=1e-2, rtol=1e-2), float(
        jnp.max(jnp.abs(out2 - ref2)))

    print("KERNEL_OK")
</pallas_src>

<mosaic_0001>
module attributes {stable_mosaic.version = 11 : i64} {
  func.func @_mlp_kernel(%arg0: i32, %arg1: memref<256x512xbf16, #tpu.memory_space<vmem>>, %arg2: memref<512x256xbf16, #tpu.memory_space<vmem>>, %arg3: memref<1x256xf32, #tpu.memory_space<vmem>>, %arg4: memref<256x128xbf16, #tpu.memory_space<vmem>>, %arg5: memref<1x128xf32, #tpu.memory_space<vmem>>, %arg6: memref<256x128xf32, #tpu.memory_space<vmem>>) attributes {dimension_semantics = [#tpu.dimension_semantics<parallel>], iteration_bounds = array<i64: 1>, scalar_prefetch = 0 : i64, scratch_operands = 0 : i64, tpu.core_type = #tpu.core_type<tc>, window_params = [{transform_indices = @transform_0, window_bounds = array<i64: 256, 512>}, {pipeline_mode = #tpu.pipeline_mode<synchronous>, transform_indices = @transform_1, window_bounds = array<i64: 512, 256>}, {pipeline_mode = #tpu.pipeline_mode<synchronous>, transform_indices = @transform_2, window_bounds = array<i64: 1, 256>}, {pipeline_mode = #tpu.pipeline_mode<synchronous>, transform_indices = @transform_3, window_bounds = array<i64: 256, 128>}, {pipeline_mode = #tpu.pipeline_mode<synchronous>, transform_indices = @transform_4, window_bounds = array<i64: 1, 128>}, {transform_indices = @transform_5, window_bounds = array<i64: 256, 128>}]} {
    %c0 = arith.constant 0 : index
    %c0_0 = arith.constant 0 : index
    %0 = vector.load %arg1[%c0, %c0_0] : memref<256x512xbf16, #tpu.memory_space<vmem>>, vector<256x512xbf16>
    %c0_1 = arith.constant 0 : index
    %c0_2 = arith.constant 0 : index
    %1 = vector.load %arg2[%c0_1, %c0_2] : memref<512x256xbf16, #tpu.memory_space<vmem>>, vector<512x256xbf16>
    %cst = arith.constant dense<0.000000e+00> : vector<256x256xf32>
    %2 = tpu.matmul %0, %1, %cst {dimension_numbers = #tpu.dot_dimension_numbers<[1], [0], [0], [1], [0, 0, 1, 1], [], []>} : vector<256x512xbf16>, vector<512x256xbf16>, vector<256x256xf32> -> vector<256x256xf32>
    %c0_3 = arith.constant 0 : index
    %c0_4 = arith.constant 0 : index
    %3 = vector.load %arg3[%c0_3, %c0_4] : memref<1x256xf32, #tpu.memory_space<vmem>>, vector<1x256xf32>
    %4 = vector.broadcast %3 : vector<1x256xf32> to vector<256x256xf32>
    %5 = arith.addf %2, %4 : vector<256x256xf32>
    %cst_5 = arith.constant 0.000000e+00 : f32
    %6 = vector.broadcast %cst_5 : f32 to vector<256x256xf32>
    %7 = arith.maximumf %5, %6 : vector<256x256xf32>
    %8 = arith.truncf %7 : vector<256x256xf32> to vector<256x256xbf16>
    %c0_6 = arith.constant 0 : index
    %c0_7 = arith.constant 0 : index
    %9 = vector.load %arg4[%c0_6, %c0_7] : memref<256x128xbf16, #tpu.memory_space<vmem>>, vector<256x128xbf16>
    %cst_8 = arith.constant dense<0.000000e+00> : vector<256x128xf32>
    %10 = tpu.matmul %8, %9, %cst_8 {dimension_numbers = #tpu.dot_dimension_numbers<[1], [0], [0], [1], [0, 0, 1, 1], [], []>} : vector<256x256xbf16>, vector<256x128xbf16>, vector<256x128xf32> -> vector<256x128xf32>
    %c0_9 = arith.constant 0 : index
    %c0_10 = arith.constant 0 : index
    %11 = vector.load %arg5[%c0_9, %c0_10] : memref<1x128xf32, #tpu.memory_space<vmem>>, vector<1x128xf32>
    %12 = vector.broadcast %11 : vector<1x128xf32> to vector<256x128xf32>
    %13 = arith.addf %10, %12 : vector<256x128xf32>
    %cst_11 = arith.constant 0.000000e+00 : f32
    %14 = vector.broadcast %cst_11 : f32 to vector<256x128xf32>
    %15 = arith.subf %14, %13 : vector<256x128xf32>
    %16 = math.exp %15 : vector<256x128xf32>
    %cst_12 = arith.constant 1.000000e+00 : f32
    %17 = vector.broadcast %cst_12 : f32 to vector<256x128xf32>
    %18 = arith.addf %17, %16 : vector<256x128xf32>
    %cst_13 = arith.constant 1.000000e+00 : f32
    %19 = vector.broadcast %cst_13 : f32 to vector<256x128xf32>
    %20 = arith.divf %19, %18 : vector<256x128xf32>
    %c0_14 = arith.constant 0 : index
    %c0_15 = arith.constant 0 : index
    %21 = vector.load %arg6[%c0_14, %c0_15] : memref<256x128xf32, #tpu.memory_space<vmem>>, vector<256x128xf32>
    tpu.vector_store %arg6[%c0_14, %c0_15], %20 {strides = array<i32>} : memref<256x128xf32, #tpu.memory_space<vmem>>, vector<256x128xf32>,
    return
  }
  func.func @transform_0(%arg0: i32) -> (i32, i32) {
    %c0_i32 = arith.constant 0 : i32
    %c0_i32_0 = arith.constant 0 : i32
    return %arg0, %c0_i32 : i32, i32
  }
  func.func @transform_1(%arg0: i32) -> (i32, i32) {
    %c0_i32 = arith.constant 0 : i32
    %c0_i32_0 = arith.constant 0 : i32
    %c0_i32_1 = arith.constant 0 : i32
    return %c0_i32, %c0_i32_0 : i32, i32
  }
  func.func @transform_2(%arg0: i32) -> (i32, i32) {
    %c0_i32 = arith.constant 0 : i32
    %c0_i32_0 = arith.constant 0 : i32
    %c0_i32_1 = arith.constant 0 : i32
    return %c0_i32, %c0_i32_0 : i32, i32
  }
  func.func @transform_3(%arg0: i32) -> (i32, i32) {
    %c0_i32 = arith.constant 0 : i32
    %c0_i32_0 = arith.constant 0 : i32
    %c0_i32_1 = arith.constant 0 : i32
    return %c0_i32, %c0_i32_0 : i32, i32
  }
  func.func @transform_4(%arg0: i32) -> (i32, i32) {
    %c0_i32 = arith.constant 0 : i32
    %c0_i32_0 = arith.constant 0 : i32
    %c0_i32_1 = arith.constant 0 : i32
    return %c0_i32, %c0_i32_0 : i32, i32
  }
  func.func @transform_5(%arg0: i32) -> (i32, i32) {
    %c0_i32 = arith.constant 0 : i32
    %c0_i32_0 = arith.constant 0 : i32
    return %arg0, %c0_i32 : i32, i32
  }
}

</mosaic_0001>

<llo_original>
// kernel: tpu_custom_call.1
$region0: #{tpu_custom_call.1}
  #allocation0 [shape = 'u32[]', space=smem, size = 0x4, offset = 0x4, fixed_abs, tag = 'smem constant byte address 0x4 - core index']
  #allocation1 [shape = 'u32[72,128]{1,0:T(1,128)}', space=vmem, size = 0x9000, scoped, tag = 'internal scratch']
  %s0 = inlined_call_operand.hbm [shape: bf16[256,512], index: 0, kind: input, shape index: {}]
  %s1 = inlined_call_operand.hbm [shape: bf16[512,256], index: 1, kind: input, shape index: {}]
  %s2 = inlined_call_operand.hbm [shape: f32[1,256], index: 2, kind: input, shape index: {}]
  %s3 = inlined_call_operand.hbm [shape: bf16[256,128], index: 3, kind: input, shape index: {}]
  %s4 = inlined_call_operand.vmem [shape: f32[1,128], index: 4, kind: input, shape index: {}]
  %s5 = inlined_call_operand.hbm [shape: f32[256,128], index: 5, kind: output, shape index: {}]
  %s6 = sld [smem:[#allocation0]]
  $region46: #{tpu_custom_call.1} parent=0
    _
  %s8 = ssub.s32 1, %s6
  %s9 = scalar_select 0, %s8, %s6
  $region1: #{tpu_custom_call.1} parent=0
    #allocation2 [shape = 'u8[262144]{0}', space=vmem, size = 0x40000, scoped, tag = 'input window, operand 0, single buffered']
    #allocation3 [shape = 's32[1]{0}', space=sflag, size = 0x4, scoped, tag = 'scoped memory for tpu_custom_call.1']
    #allocation4 [shape = 's32[1]{0}', space=sflag, size = 0x4, scoped, tag = 'scoped memory for tpu_custom_call.1']
    #allocation5 [shape = 'u8[262144]{0}', space=vmem, size = 0x40000, scoped, tag = 'input window, operand 1, single buffered']
    #allocation6 [shape = 's32[1]{0}', space=sflag, size = 0x4, scoped, tag = 'scoped memory for tpu_custom_call.1']
    #allocation7 [shape = 'u8[1024]{0}', space=vmem, size = 0x400, scoped, tag = 'input window, operand 2, single buffered']
    #allocation8 [shape = 'u8[65536]{0}', space=vmem, size = 0x10000, scoped, tag = 'input window, operand 3, single buffered']
    #allocation9 [shape = 's32[1]{0}', space=sflag, size = 0x4, scoped, tag = 'scoped memory for tpu_custom_call.1']
    #allocation10 [shape = 'u8[131072]{0}', space=vmem, size = 0x20000, scoped, tag = 'output window, operand 0, single buffered']
    %10 = vsyncpa [#allocation3], 0
    %11 = vsyncpa [#allocation6], 0
    %12 = vsyncpa [#allocation9], 0
    %13 = vsyncpa [#allocation4], 0
    // Predicated region
    $region2: #{tpu_custom_call.1} parent=1 // pred_check
      _
    $region3: #{tpu_custom_call.1} parent=1 // pred_check_branch
      %15 = sbr.rel (0) target = $region5
    $region4: #{tpu_custom_call.1} parent=1 // pred_region
      %17 = vsyncadd [#allocation3], 0
      %s18 = sshll.u32 %s0, 4
      %s19 = int_to_ptr.hbm [resolvable:$true] %s18
      %s20 = sshll.u32 [#allocation2], 4
      %s21 = int_to_ptr.vmem [resolvable:$true] %s20
      %26 = dma.hbm_to_vmem [thread:$0]  %s19, 8192, %s21, [#allocation3], 256, 256, 16
    $region5: #{tpu_custom_call.1} parent=1 // pred_fallthru
      _
    // Predicated region
    $region6: #{tpu_custom_call.1} parent=1 // pred_check
      _
    $region7: #{tpu_custom_call.1} parent=1 // pred_check_branch
      %28 = sbr.rel (0) target = $region9
    $region8: #{tpu_custom_call.1} parent=1 // pred_region
      %30 = vsyncadd [#allocation6], 0
      %s31 = sshll.u32 %s1, 4
      %s32 = int_to_ptr.hbm [resolvable:$true] %s31
      %s33 = sshll.u32 [#allocation5], 4
      %s34 = int_to_ptr.vmem [resolvable:$true] %s33
      %39 = dma.hbm_to_vmem [thread:$0]  %s32, 8192, %s34, [#allocation6], 128, 128, 8
    $region9: #{tpu_custom_call.1} parent=1 // pred_fallthru
      _
    // Predicated region
    $region10: #{tpu_custom_call.1} parent=1 // pred_check
      _
    $region11: #{tpu_custom_call.1} parent=1 // pred_check_branch
      %41 = sbr.rel (0) target = $region13
    $region12: #{tpu_custom_call.1} parent=1 // pred_region
      %43 = vsyncadd [#allocation6], 0
      %s45 = sshll.u32 %s2, 4
      %s46 = int_to_ptr.hbm [resolvable:$true] %s45
      %s47 = sshll.u32 [#allocation7], 4
      %s48 = int_to_ptr.vmem [resolvable:$true] %s47
      %50 = dma.hbm_to_vmem [thread:$0]  %s46, 32, %s48, [#allocation6]
    $region13: #{tpu_custom_call.1} parent=1 // pred_fallthru
      _
    // Predicated region
    $region14: #{tpu_custom_call.1} parent=1 // pred_check
      _
    $region15: #{tpu_custom_call.1} parent=1 // pred_check_branch
      %52 = sbr.rel (0) target = $region17
    $region16: #{tpu_custom_call.1} parent=1 // pred_region
      %54 = vsyncadd [#allocation9], 0
      %s55 = sshll.u32 %s3, 4
      %s56 = int_to_ptr.hbm [resolvable:$true] %s55
      %s57 = sshll.u32 [#allocation8], 4
      %s58 = int_to_ptr.vmem [resolvable:$true] %s57
      %63 = dma.hbm_to_vmem [thread:$0]  %s56, 2048, %s58, [#allocation9], 64, 64, 4
    $region17: #{tpu_custom_call.1} parent=1 // pred_fallthru
      _
    // Predicated region
    $region18: #{tpu_custom_call.1} parent=1 // pred_check
      _
    $region19: #{tpu_custom_call.1} parent=1 // pred_check_branch
      %65 = sbr.rel (0) target = $region21
    $region20: #{tpu_custom_call.1} parent=1 // pred_region
      _
    $region21: #{tpu_custom_call.1} parent=1 // pred_fallthru
      _
    // Predicated region
    $region22: #{tpu_custom_call.1} parent=1 // pred_check
      _
    $region23: #{tpu_custom_call.1} parent=1 // pred_check_branch
      %67 = sbr.rel (0) target = $region25
    $region24: #{tpu_custom_call.1} parent=1 // pred_region
      %69 = dma.done [#allocation3], 8192
    $region25: #{tpu_custom_call.1} parent=1 // pred_fallthru
      _
    // Predicated region
    $region26: #{tpu_custom_call.1} parent=1 // pred_check
      _
    $region27: #{tpu_custom_call.1} parent=1 // pred_check_branch
      %71 = sbr.rel (0) target = $region29
    $region28: #{tpu_custom_call.1} parent=1 // pred_region
      %73 = dma.done [#allocation6], 8192
    $region29: #{tpu_custom_call.1} parent=1 // pred_fallthru
      _
    // Predicated region
    $region30: #{tpu_custom_call.1} parent=1 // pred_check
      _
    $region31: #{tpu_custom_call.1} parent=1 // pred_check_branch
      %75 = sbr.rel (0) target = $region33
    $region32: #{tpu_custom_call.1} parent=1 // pred_region
      %77 = dma.done [#allocation6], 32
    $region33: #{tpu_custom_call.1} parent=1 // pred_fallthru
      _
    // Predicated region
    $region34: #{tpu_custom_call.1} parent=1 // pred_check
      _
    $region35: #{tpu_custom_call.1} parent=1 // pred_check_branch
      %79 = sbr.rel (0) target = $region37
    $region36: #{tpu_custom_call.1} parent=1 // pred_region
      %81 = dma.done [#allocation9], 2048
    $region37: #{tpu_custom_call.1} parent=1 // pred_fallthru
      _
    %v82 = vld [vmem:[#allocation2] sm:$0xff]
    %v83 = vld [vmem:[#allocation2 + $0x8] sm:$0xff]
    %v84 = vld [vmem:[#allocation2 + $0x10] sm:$0xff]
    %v85 = vld [vmem:[#allocation2 + $0x18] sm:$0xff]
    %v86 = vld [vmem:[#allocation2 + $0x20] sm:$0xff]
    %v87 = vld [vmem:[#allocation2 + $0x28] sm:$0xff]
    %v88 = vld [vmem:[#allocation2 + $0x30] sm:$0xff]
    %v89 = vld [vmem:[#allocation2 + $0x38] sm:$0xff]
    %v90 = vld [vmem:[#allocation2 + $0x40] sm:$0xff]
    %v91 = vld [vmem:[#allocation2 + $0x48] sm:$0xff]
    %v92 = vld [vmem:[#allocation2 + $0x50] sm:$0xff]
    %v93 = vld [vmem:[#allocation2 + $0x58] sm:$0xff]
    %v94 = vld [vmem:[#allocation2 + $0x60] sm:$0xff]
    %v95 = vld [vmem:[#allocation2 + $0x68] sm:$0xff]
    %v96 = vld [vmem:[#allocation2 + $0x70] sm:$0xff]
    %v97 = vld [vmem:[#allocation2 + $0x78] sm:$0xff]
    %v98 = vld [vmem:[#allocation2 + $0x80] sm:$0xff]
    %v99 = vld [vmem:[#allocation2 + $0x88] sm:$0xff]
    %v100 = vld [vmem:[#allocation2 + $0x90] sm:$0xff]
    %v101 = vld [vmem:[#allocation2 + $0x98] sm:$0xff]
    %v102 = vld [vmem:[#allocation2 + $0xa0] sm:$0xff]
    %v103 = vld [vmem:[#allocation2 + $0xa8] sm:$0xff]
    %v104 = vld [vmem:[#allocation2 + $0xb0] sm:$0xff]
    %v105 = vld [vmem:[#allocation2 + $0xb8] sm:$0xff]
    %v106 = vld [vmem:[#allocation2 + $0xc0] sm:$0xff]
    %v107 = vld [vmem:[#allocation2 + $0xc8] sm:$0xff]
    %v108 = vld [vmem:[#allocation2 + $0xd0] sm:$0xff]
    %v109 = vld [vmem:[#allocation2 + $0xd8] sm:$0xff]
    %v110 = vld [vmem:[#allocation2 + $0xe0] sm:$0xff]
    %v111 = vld [vmem:[#allocation2 + $0xe8] sm:$0xff]
    %v112 = vld [vmem:[#allocation2 + $0xf0] sm:$0xff]
    %v113 = vld [vmem:[#allocation2 + $0xf8] sm:$0xff]
    %v114 = vld [vmem:[#allocation2 + $0x100] sm:$0xff]
    %v115 = vld [vmem:[#allocation2 + $0x108] sm:$0xff]
    %v116 = vld [vmem:[#allocation2 + $0x110] sm:$0xff]
    %v117 = vld [vmem:[#allocation2 + $0x118] sm:$0xff]
    %v118 = vld [vmem:[#allocation2 + $0x120] sm:$0xff]
    %v119 = vld [vmem:[#allocation2 + $0x128] sm:$0xff]
    %v120 = vld [vmem:[#allocation2 + $0x130] sm:$0xff]
    %v121 = vld [vmem:[#allocation2 + $0x138] sm:$0xff]
    %v122 = vld [vmem:[#allocation2 + $0x140] sm:$0xff]
    %v123 = vld [vmem:[#allocation2 + $0x148] sm:$0xff]
    %v124 = vld [vmem:[#allocation2 + $0x150] sm:$0xff]
    %v125 = vld [vmem:[#allocation2 + $0x158] sm:$0xff]
    %v126 = vld [vmem:[#allocation2 + $0x160] sm:$0xff]
    %v127 = vld [vmem:[#allocation2 + $0x168] sm:$0xff]
    %v128 = vld [vmem:[#allocation2 + $0x170] sm:$0xff]
    %v129 = vld [vmem:[#allocation2 + $0x178] sm:$0xff]
    %v130 = vld [vmem:[#allocation2 + $0x180] sm:$0xff]
    %v131 = vld [vmem:[#allocation2 + $0x188] sm:$0xff]
    %v132 = vld [vmem:[#allocation2 + $0x190] sm:$0xff]
    %v133 = vld [vmem:[#allocation2 + $0x198] sm:$0xff]
    %v134 = vld [vmem:[#allocation2 + $0x1a0] sm:$0xff]
    %v135 = vld [vmem:[#allocation2 + $0x1a8] sm:$0xff]
    %v136 = vld [vmem:[#allocation2 + $0x1b0] sm:$0xff]
    %v137 = vld [vmem:[#allocation2 + $0x1b8] sm:$0xff]
    %v138 = vld [vmem:[#allocation2 + $0x1c0] sm:$0xff]
    %v139 = vld [vmem:[#allocation2 + $0x1c8] sm:$0xff]
    %v140 = vld [vmem:[#allocation2 + $0x1d0] sm:$0xff]
    %v141 = vld [vmem:[#allocation2 + $0x1d8] sm:$0xff]
    %v142 = vld [vmem:[#allocation2 + $0x1e0] sm:$0xff]
    %v143 = vld [vmem:[#allocation2 + $0x1e8] sm:$0xff]
    %v144 = vld [vmem:[#allocation2 + $0x1f0] sm:$0xff]
    %v145 = vld [vmem:[#allocation2 + $0x1f8] sm:$0xff]
    %v146 = vld [vmem:[#allocation5] sm:$0xff]
    %v147 = vld [vmem:[#allocation5 + $0x8] sm:$0xff]
    %v148 = vld [vmem:[#allocation5 + $0x10] sm:$0xff]
    %v149 = vld [vmem:[#allocation5 + $0x18] sm:$0xff]
    %v150 = vld [vmem:[#allocation5 + $0x20] sm:$0xff]
    %v151 = vld [vmem:[#allocation5 + $0x28] sm:$0xff]
    %v152 = vld [vmem:[#allocation5 + $0x30] sm:$0xff]
    %v153 = vld [vmem:[#allocation5 + $0x38] sm:$0xff]
    %v154 = vld [vmem:[#allocation5 + $0x40] sm:$0xff]
    %v155 = vld [vmem:[#allocation5 + $0x48] sm:$0xff]
    %v156 = vld [vmem:[#allocation5 + $0x50] sm:$0xff]
    %v157 = vld [vmem:[#allocation5 + $0x58] sm:$0xff]
    %v158 = vld [vmem:[#allocation5 + $0x60] sm:$0xff]
    %v159 = vld [vmem:[#allocation5 + $0x68] sm:$0xff]
    %v160 = vld [vmem:[#allocation5 + $0x70] sm:$0xff]
    %v161 = vld [vmem:[#allocation5 + $0x78] sm:$0xff]
    %v162 = vld [vmem:[#allocation5 + $0x80] sm:$0xff]
    %v163 = vld [vmem:[#allocation5 + $0x88] sm:$0xff]
    %v164 = vld [vmem:[#allocation5 + $0x90] sm:$0xff]
    %v165 = vld [vmem:[#allocation5 + $0x98] sm:$0xff]
    %v166 = vld [vmem:[#allocation5 + $0xa0] sm:$0xff]
    %v167 = vld [vmem:[#allocation5 + $0xa8] sm:$0xff]
    %v168 = vld [vmem:[#allocation5 + $0xb0] sm:$0xff]
    %v169 = vld [vmem:[#allocation5 + $0xb8] sm:$0xff]
    %v170 = vld [vmem:[#allocation5 + $0xc0] sm:$0xff]
    %v171 = vld [vmem:[#allocation5 + $0xc8] sm:$0xff]
    %v172 = vld [vmem:[#allocation5 + $0xd0] sm:$0xff]
    %v173 = vld [vmem:[#allocation5 + $0xd8] sm:$0xff]
    %v174 = vld [vmem:[#allocation5 + $0xe0] sm:$0xff]
    %v175 = vld [vmem:[#allocation5 + $0xe8] sm:$0xff]
    %v176 = vld [vmem:[#allocation5 + $0xf0] sm:$0xff]
    %v177 = vld [vmem:[#allocation5 + $0xf8] sm:$0xff]
    %v178 = vld [vmem:[#allocation5 + $0x100] sm:$0xff]
    %v179 = vld [vmem:[#allocation5 + $0x108] sm:$0xff]
    %v180 = vld [vmem:[#allocation5 + $0x110] sm:$0xff]
    %v181 = vld [vmem:[#allocation5 + $0x118] sm:$0xff]
    %v182 = vld [vmem:[#allocation5 + $0x120] sm:$0xff]
    %v183 = vld [vmem:[#allocation5 + $0x128] sm:$0xff]
    %v184 = vld [vmem:[#allocation5 + $0x130] sm:$0xff]
    %v185 = vld [vmem:[#allocation5 + $0x138] sm:$0xff]
    %v186 = vld [vmem:[#allocation5 + $0x140] sm:$0xff]
    %v187 = vld [vmem:[#allocation5 + $0x148] sm:$0xff]
    %v188 = vld [vmem:[#allocation5 + $0x150] sm:$0xff]
    %v189 = vld [vmem:[#allocation5 + $0x158] sm:$0xff]
    %v190 = vld [vmem:[#allocation5 + $0x160] sm:$0xff]
    %v191 = vld [vmem:[#allocation5 + $0x168] sm:$0xff]
    %v192 = vld [vmem:[#allocation5 + $0x170] sm:$0xff]
    %v193 = vld [vmem:[#allocation5 + $0x178] sm:$0xff]
    %v194 = vld [vmem:[#allocation5 + $0x180] sm:$0xff]
    %v195 = vld [vmem:[#allocation5 + $0x188] sm:$0xff]
    %v196 = vld [vmem:[#allocation5 + $0x190] sm:$0xff]
    %v197 = vld [vmem:[#allocation5 + $0x198] sm:$0xff]
    %v198 = vld [vmem:[#allocation5 + $0x1a0] sm:$0xff]
    %v199 = vld [vmem:[#allocation5 + $0x1a8] sm:$0xff]
    %v200 = vld [vmem:[#allocation5 + $0x1b0] sm:$0xff]
    %v201 = vld [vmem:[#allocation5 + $0x1b8] sm:$0xff]
    %v202 = vld [vmem:[#allocation5 + $0x1c0] sm:$0xff]
    %v203 = vld [vmem:[#allocation5 + $0x1c8] sm:$0xff]
    %v204 = vld [vmem:[#allocation5 + $0x1d0] sm:$0xff]
    %v205 = vld [vmem:[#allocation5 + $0x1d8] sm:$0xff]
    %v206 = vld [vmem:[#allocation5 + $0x1e0] sm:$0xff]
    %v207 = vld [vmem:[#allocation5 + $0x1e8] sm:$0xff]
    %v208 = vld [vmem:[#allocation5 + $0x1f0] sm:$0xff]
    %v209 = vld [vmem:[#allocation5 + $0x1f8] sm:$0xff]
    %v210 = vld [vmem:[#allocation7] sm:$0x3]
    %v212 = vperm.slane %v210, 0
    %v213 = vperm.slane %v210, 1
    %v280 = vunpack.c.l.b16 %v82
    %v281 = vunpack.c.h.b16 %v82
    %v282 = vunpack.c.l.b16 %v83
    %v283 = vunpack.c.h.b16 %v83
    %v284 = vunpack.c.l.b16 %v84
    %v285 = vunpack.c.h.b16 %v84
    %v286 = vunpack.c.l.b16 %v85
    %v287 = vunpack.c.h.b16 %v85
    %v288 = vunpack.c.l.b16 %v86
    %v289 = vunpack.c.h.b16 %v86
    %v290 = vunpack.c.l.b16 %v87
    %v291 = vunpack.c.h.b16 %v87
    %v292 = vunpack.c.l.b16 %v88
    %v293 = vunpack.c.h.b16 %v88
    %v294 = vunpack.c.l.b16 %v89
    %v295 = vunpack.c.h.b16 %v89
    %v296 = vunpack.c.l.b16 %v90
    %v297 = vunpack.c.h.b16 %v90
    %v298 = vunpack.c.l.b16 %v91
    %v299 = vunpack.c.h.b16 %v91
    %v300 = vunpack.c.l.b16 %v92
    %v301 = vunpack.c.h.b16 %v92
    %v302 = vunpack.c.l.b16 %v93
    %v303 = vunpack.c.h.b16 %v93
    %v304 = vunpack.c.l.b16 %v94
    %v305 = vunpack.c.h.b16 %v94
    %v306 = vunpack.c.l.b16 %v95
    %v307 = vunpack.c.h.b16 %v95
    %v308 = vunpack.c.l.b16 %v96
    %v309 = vunpack.c.h.b16 %v96
    %v310 = vunpack.c.l.b16 %v97
    %v311 = vunpack.c.h.b16 %v97
    %v312 = vunpack.c.l.b16 %v98
    %v313 = vunpack.c.h.b16 %v98
    %v314 = vunpack.c.l.b16 %v99
    %v315 = vunpack.c.h.b16 %v99
    %v316 = vunpack.c.l.b16 %v100
    %v317 = vunpack.c.h.b16 %v100
    %v318 = vunpack.c.l.b16 %v101
    %v319 = vunpack.c.h.b16 %v101
    %v320 = vunpack.c.l.b16 %v102
    %v321 = vunpack.c.h.b16 %v102
    %v322 = vunpack.c.l.b16 %v103
    %v323 = vunpack.c.h.b16 %v103
    %v324 = vunpack.c.l.b16 %v104
    %v325 = vunpack.c.h.b16 %v104
    %v326 = vunpack.c.l.b16 %v105
    %v327 = vunpack.c.h.b16 %v105
    %v328 = vunpack.c.l.b16 %v106
    %v329 = vunpack.c.h.b16 %v106
    %v330 = vunpack.c.l.b16 %v107
    %v331 = vunpack.c.h.b16 %v107
    %v332 = vunpack.c.l.b16 %v108
    %v333 = vunpack.c.h.b16 %v108
    %v334 = vunpack.c.l.b16 %v109
    %v335 = vunpack.c.h.b16 %v109
    %v336 = vunpack.c.l.b16 %v110
    %v337 = vunpack.c.h.b16 %v110
    %v338 = vunpack.c.l.b16 %v111
    %v339 = vunpack.c.h.b16 %v111
    %v340 = vunpack.c.l.b16 %v112
    %v341 = vunpack.c.h.b16 %v112
    %v342 = vunpack.c.l.b16 %v113
    %v343 = vunpack.c.h.b16 %v113
    %v344 = vunpack.c.l.b16 %v114
    %v345 = vunpack.c.h.b16 %v114
    %v346 = vunpack.c.l.b16 %v115
    %v347 = vunpack.c.h.b16 %v115
    %v348 = vunpack.c.l.b16 %v116
    %v349 = vunpack.c.h.b16 %v116
    %v350 = vunpack.c.l.b16 %v117
    %v351 = vunpack.c.h.b16 %v117
    %v352 = vunpack.c.l.b16 %v118
    %v353 = vunpack.c.h.b16 %v118
    %v354 = vunpack.c.l.b16 %v119
    %v355 = vunpack.c.h.b16 %v119
    %v356 = vunpack.c.l.b16 %v120
    %v357 = vunpack.c.h.b16 %v120
    %v358 = vunpack.c.l.b16 %v121
    %v359 = vunpack.c.h.b16 %v121
    %v360 = vunpack.c.l.b16 %v122
    %v361 = vunpack.c.h.b16 %v122
    %v362 = vunpack.c.l.b16 %v123
    %v363 = vunpack.c.h.b16 %v123
    %v364 = vunpack.c.l.b16 %v124
    %v365 = vunpack.c.h.b16 %v124
    %v366 = vunpack.c.l.b16 %v125
    %v367 = vunpack.c.h.b16 %v125
    %v368 = vunpack.c.l.b16 %v126
    %v369 = vunpack.c.h.b16 %v126
    %v370 = vunpack.c.l.b16 %v127
    %v371 = vunpack.c.h.b16 %v127
    %v372 = vunpack.c.l.b16 %v128
    %v373 = vunpack.c.h.b16 %v128
    %v374 = vunpack.c.l.b16 %v129
    %v375 = vunpack.c.h.b16 %v129
    %v376 = vunpack.c.l.b16 %v130
    %v377 = vunpack.c.h.b16 %v130
    %v378 = vunpack.c.l.b16 %v131
    %v379 = vunpack.c.h.b16 %v131
    %v380 = vunpack.c.l.b16 %v132
    %v381 = vunpack.c.h.b16 %v132
    %v382 = vunpack.c.l.b16 %v133
    %v383 = vunpack.c.h.b16 %v133
    %v384 = vunpack.c.l.b16 %v134
    %v385 = vunpack.c.h.b16 %v134
    %v386 = vunpack.c.l.b16 %v135
    %v387 = vunpack.c.h.b16 %v135
    %v388 = vunpack.c.l.b16 %v136
    %v389 = vunpack.c.h.b16 %v136
    %v390 = vunpack.c.l.b16 %v137
    %v391 = vunpack.c.h.b16 %v137
    %v392 = vunpack.c.l.b16 %v138
    %v393 = vunpack.c.h.b16 %v138
    %v394 = vunpack.c.l.b16 %v139
    %v395 = vunpack.c.h.b16 %v139
    %v396 = vunpack.c.l.b16 %v140
    %v397 = vunpack.c.h.b16 %v140
    %v398 = vunpack.c.l.b16 %v141
    %v399 = vunpack.c.h.b16 %v141
    %v400 = vunpack.c.l.b16 %v142
    %v401 = vunpack.c.h.b16 %v142
    %v402 = vunpack.c.l.b16 %v143
    %v403 = vunpack.c.h.b16 %v143
    %v404 = vunpack.c.l.b16 %v144
    %v405 = vunpack.c.h.b16 %v144
    %v406 = vunpack.c.l.b16 %v145
    %v407 = vunpack.c.h.b16 %v145
    %v408 = vpack.c.b16 %v284, %v280
    %v409 = vpack.c.b16 %v285, %v281
    %v410 = vpack.c.b16 %v286, %v282
    %v411 = vpack.c.b16 %v287, %v283
    %v412 = vpack.c.b16 %v292, %v288
    %v413 = vpack.c.b16 %v293, %v289
    %v414 = vpack.c.b16 %v294, %v290
    %v415 = vpack.c.b16 %v295, %v291
    %v416 = vpack.c.b16 %v300, %v296
    %v417 = vpack.c.b16 %v301, %v297
    %v418 = vpack.c.b16 %v302, %v298
    %v419 = vpack.c.b16 %v303, %v299
    %v420 = vpack.c.b16 %v308, %v304
    %v421 = vpack.c.b16 %v309, %v305
    %v422 = vpack.c.b16 %v310, %v306
    %v423 = vpack.c.b16 %v311, %v307
    %v424 = vpack.c.b16 %v316, %v312
    %v425 = vpack.c.b16 %v317, %v313
    %v426 = vpack.c.b16 %v318, %v314
    %v427 = vpack.c.b16 %v319, %v315
    %v428 = vpack.c.b16 %v324, %v320
    %v429 = vpack.c.b16 %v325, %v321
    %v430 = vpack.c.b16 %v326, %v322
    %v431 = vpack.c.b16 %v327, %v323
    %v432 = vpack.c.b16 %v332, %v328
    %v433 = vpack.c.b16 %v333, %v329
    %v434 = vpack.c.b16 %v334, %v330
    %v435 = vpack.c.b16 %v335, %v331
    %v436 = vpack.c.b16 %v340, %v336
    %v437 = vpack.c.b16 %v341, %v337
    %v438 = vpack.c.b16 %v342, %v338
    %v439 = vpack.c.b16 %v343, %v339
    %v440 = vpack.c.b16 %v348, %v344
    %v441 = vpack.c.b16 %v349, %v345
    %v442 = vpack.c.b16 %v350, %v346
    %v443 = vpack.c.b16 %v351, %v347
    %v444 = vpack.c.b16 %v356, %v352
    %v445 = vpack.c.b16 %v357, %v353
    %v446 = vpack.c.b16 %v358, %v354
    %v447 = vpack.c.b16 %v359, %v355
    %v448 = vpack.c.b16 %v364, %v360
    %v449 = vpack.c.b16 %v365, %v361
    %v450 = vpack.c.b16 %v366, %v362
    %v451 = vpack.c.b16 %v367, %v363
    %v452 = vpack.c.b16 %v372, %v368
    %v453 = vpack.c.b16 %v373, %v369
    %v454 = vpack.c.b16 %v374, %v370
    %v455 = vpack.c.b16 %v375, %v371
    %v456 = vpack.c.b16 %v380, %v376
    %v457 = vpack.c.b16 %v381, %v377
    %v458 = vpack.c.b16 %v382, %v378
    %v459 = vpack.c.b16 %v383, %v379
    %v460 = vpack.c.b16 %v388, %v384
    %v461 = vpack.c.b16 %v389, %v385
    %v462 = vpack.c.b16 %v390, %v386
    %v463 = vpack.c.b16 %v391, %v387
    %v464 = vpack.c.b16 %v396, %v392
    %v465 = vpack.c.b16 %v397, %v393
    %v466 = vpack.c.b16 %v398, %v394
    %v467 = vpack.c.b16 %v399, %v395
    %v468 = vpack.c.b16 %v404, %v400
    %v469 = vpack.c.b16 %v405, %v401
    %v470 = vpack.c.b16 %v406, %v402
    %v471 = vpack.c.b16 %v407, %v403
    %v600 = vunpack.c.l.b16 %v146
    %v601 = vunpack.c.h.b16 %v146
    %v602 = vunpack.c.l.b16 %v147
    %v603 = vunpack.c.h.b16 %v147
    %v604 = vunpack.c.l.b16 %v148
    %v605 = vunpack.c.h.b16 %v148
    %v606 = vunpack.c.l.b16 %v149
    %v607 = vunpack.c.h.b16 %v149
    %v608 = vunpack.c.l.b16 %v150
    %v609 = vunpack.c.h.b16 %v150
    %v610 = vunpack.c.l.b16 %v151
    %v611 = vunpack.c.h.b16 %v151
    %v612 = vunpack.c.l.b16 %v152
    %v613 = vunpack.c.h.b16 %v152
    %v614 = vunpack.c.l.b16 %v153
    %v615 = vunpack.c.h.b16 %v153
    %v616 = vunpack.c.l.b16 %v154
    %v617 = vunpack.c.h.b16 %v154
    %v618 = vunpack.c.l.b16 %v155
    %v619 = vunpack.c.h.b16 %v155
    %v620 = vunpack.c.l.b16 %v156
    %v621 = vunpack.c.h.b16 %v156
    %v622 = vunpack.c.l.b16 %v157
    %v623 = vunpack.c.h.b16 %v157
    %v624 = vunpack.c.l.b16 %v158
    %v625 = vunpack.c.h.b16 %v158
    %v626 = vunpack.c.l.b16 %v159
    %v627 = vunpack.c.h.b16 %v159
    %v628 = vunpack.c.l.b16 %v160
    %v629 = vunpack.c.h.b16 %v160
    %v630 = vunpack.c.l.b16 %v161
    %v631 = vunpack.c.h.b16 %v161
    %v632 = vunpack.c.l.b16 %v162
    %v633 = vunpack.c.h.b16 %v162
    %v634 = vunpack.c.l.b16 %v163
    %v635 = vunpack.c.h.b16 %v163
    %v636 = vunpack.c.l.b16 %v164
    %v637 = vunpack.c.h.b16 %v164
    %v638 = vunpack.c.l.b16 %v165
    %v639 = vunpack.c.h.b16 %v165
    %v640 = vunpack.c.l.b16 %v166
    %v641 = vunpack.c.h.b16 %v166
    %v642 = vunpack.c.l.b16 %v167
    %v643 = vunpack.c.h.b16 %v167
    %v644 = vunpack.c.l.b16 %v168
    %v645 = vunpack.c.h.b16 %v168
    %v646 = vunpack.c.l.b16 %v169
    %v647 = vunpack.c.h.b16 %v169
    %v648 = vunpack.c.l.b16 %v170
    %v649 = vunpack.c.h.b16 %v170
    %v650 = vunpack.c.l.b16 %v171
    %v651 = vunpack.c.h.b16 %v171
    %v652 = vunpack.c.l.b16 %v172
    %v653 = vunpack.c.h.b16 %v172
    %v654 = vunpack.c.l.b16 %v173
    %v655 = vunpack.c.h.b16 %v173
    %v656 = vunpack.c.l.b16 %v174
    %v657 = vunpack.c.h.b16 %v174
    %v658 = vunpack.c.l.b16 %v175
    %v659 = vunpack.c.h.b16 %v175
    %v660 = vunpack.c.l.b16 %v176
    %v661 = vunpack.c.h.b16 %v176
    %v662 = vunpack.c.l.b16 %v177
    %v663 = vunpack.c.h.b16 %v177
    %v664 = vunpack.c.l.b16 %v178
    %v665 = vunpack.c.h.b16 %v178
    %v666 = vunpack.c.l.b16 %v179
    %v667 = vunpack.c.h.b16 %v179
    %v668 = vunpack.c.l.b16 %v180
    %v669 = vunpack.c.h.b16 %v180
    %v670 = vunpack.c.l.b16 %v181
    %v671 = vunpack.c.h.b16 %v181
    %v672 = vunpack.c.l.b16 %v182
    %v673 = vunpack.c.h.b16 %v182
    %v674 = vunpack.c.l.b16 %v183
    %v675 = vunpack.c.h.b16 %v183
    %v676 = vunpack.c.l.b16 %v184
    %v677 = vunpack.c.h.b16 %v184
    %v678 = vunpack.c.l.b16 %v185
    %v679 = vunpack.c.h.b16 %v185
    %v680 = vunpack.c.l.b16 %v186
    %v681 = vunpack.c.h.b16 %v186
    %v682 = vunpack.c.l.b16 %v187
    %v683 = vunpack.c.h.b16 %v187
    %v684 = vunpack.c.l.b16 %v188
    %v685 = vunpack.c.h.b16 %v188
    %v686 = vunpack.c.l.b16 %v189
    %v687 = vunpack.c.h.b16 %v189
    %v688 = vunpack.c.l.b16 %v190
    %v689 = vunpack.c.h.b16 %v190
    %v690 = vunpack.c.l.b16 %v191
    %v691 = vunpack.c.h.b16 %v191
    %v692 = vunpack.c.l.b16 %v192
    %v693 = vunpack.c.h.b16 %v192
    %v694 = vunpack.c.l.b16 %v193
    %v695 = vunpack.c.h.b16 %v193
    %v696 = vunpack.c.l.b16 %v194
    %v697 = vunpack.c.h.b16 %v194
    %v698 = vunpack.c.l.b16 %v195
    %v699 = vunpack.c.h.b16 %v195
    %v700 = vunpack.c.l.b16 %v196
    %v701 = vunpack.c.h.b16 %v196
    %v702 = vunpack.c.l.b16 %v197
    %v703 = vunpack.c.h.b16 %v197
    %v704 = vunpack.c.l.b16 %v198
    %v705 = vunpack.c.h.b16 %v198
    %v706 = vunpack.c.l.b16 %v199
    %v707 = vunpack.c.h.b16 %v199
    %v708 = vunpack.c.l.b16 %v200
    %v709 = vunpack.c.h.b16 %v200
    %v710 = vunpack.c.l.b16 %v201
    %v711 = vunpack.c.h.b16 %v201
    %v712 = vunpack.c.l.b16 %v202
    %v713 = vunpack.c.h.b16 %v202
    %v714 = vunpack.c.l.b16 %v203
    %v715 = vunpack.c.h.b16 %v203
    %v716 = vunpack.c.l.b16 %v204
    %v717 = vunpack.c.h.b16 %v204
    %v718 = vunpack.c.l.b16 %v205
    %v719 = vunpack.c.h.b16 %v205
    %v720 = vunpack.c.l.b16 %v206
    %v721 = vunpack.c.h.b16 %v206
    %v722 = vunpack.c.l.b16 %v207
    %v723 = vunpack.c.h.b16 %v207
    %v724 = vunpack.c.l.b16 %v208
    %v725 = vunpack.c.h.b16 %v208
    %v726 = vunpack.c.l.b16 %v209
    %v727 = vunpack.c.h.b16 %v209
    %v728 = vpack.c.b16 %v602, %v600
    %v729 = vpack.c.b16 %v603, %v601
    %v730 = vpack.c.b16 %v606, %v604
    %v731 = vpack.c.b16 %v607, %v605
    %v732 = vpack.c.b16 %v610, %v608
    %v733 = vpack.c.b16 %v611, %v609
    %v734 = vpack.c.b16 %v614, %v612
    %v735 = vpack.c.b16 %v615, %v613
    %v736 = vpack.c.b16 %v618, %v616
    %v737 = vpack.c.b16 %v619, %v617
    %v738 = vpack.c.b16 %v622, %v620
    %v739 = vpack.c.b16 %v623, %v621
    %v740 = vpack.c.b16 %v626, %v624
    %v741 = vpack.c.b16 %v627, %v625
    %v742 = vpack.c.b16 %v630, %v628
    %v743 = vpack.c.b16 %v631, %v629
    %v744 = vpack.c.b16 %v634, %v632
    %v745 = vpack.c.b16 %v635, %v633
    %v746 = vpack.c.b16 %v638, %v636
    %v747 = vpack.c.b16 %v639, %v637
    %v748 = vpack.c.b16 %v642, %v640
    %v749 = vpack.c.b16 %v643, %v641
    %v750 = vpack.c.b16 %v646, %v644
    %v751 = vpack.c.b16 %v647, %v645
    %v752 = vpack.c.b16 %v650, %v648
    %v753 = vpack.c.b16 %v651, %v649
    %v754 = vpack.c.b16 %v654, %v652
    %v755 = vpack.c.b16 %v655, %v653
    %v756 = vpack.c.b16 %v658, %v656
    %v757 = vpack.c.b16 %v659, %v657
    %v758 = vpack.c.b16 %v662, %v660
    %v759 = vpack.c.b16 %v663, %v661
    %v760 = vpack.c.b16 %v666, %v664
    %v761 = vpack.c.b16 %v667, %v665
    %v762 = vpack.c.b16 %v670, %v668
    %v763 = vpack.c.b16 %v671, %v669
    %v764 = vpack.c.b16 %v674, %v672
    %v765 = vpack.c.b16 %v675, %v673
    %v766 = vpack.c.b16 %v678, %v676
    %v767 = vpack.c.b16 %v679, %v677
    %v768 = vpack.c.b16 %v682, %v680
    %v769 = vpack.c.b16 %v683, %v681
    %v770 = vpack.c.b16 %v686, %v684
    %v771 = vpack.c.b16 %v687, %v685
    %v772 = vpack.c.b16 %v690, %v688
    %v773 = vpack.c.b16 %v691, %v689
    %v774 = vpack.c.b16 %v694, %v692
    %v775 = vpack.c.b16 %v695, %v693
    %v776 = vpack.c.b16 %v698, %v696
    %v777 = vpack.c.b16 %v699, %v697
    %v778 = vpack.c.b16 %v702, %v700
    %v779 = vpack.c.b16 %v703, %v701
    %v780 = vpack.c.b16 %v706, %v704
    %v781 = vpack.c.b16 %v707, %v705
    %v782 = vpack.c.b16 %v710, %v708
    %v783 = vpack.c.b16 %v711, %v709
    %v784 = vpack.c.b16 %v714, %v712
    %v785 = vpack.c.b16 %v715, %v713
    %v786 = vpack.c.b16 %v718, %v716
    %v787 = vpack.c.b16 %v719, %v717
    %v788 = vpack.c.b16 %v722, %v720
    %v789 = vpack.c.b16 %v723, %v721
    %v790 = vpack.c.b16 %v726, %v724
    %v791 = vpack.c.b16 %v727, %v725
    %856 = vmatpush.bf16.msra.mxu0 %v742
    %857 = vmatpush.bf16.msra.mxu0 %v740
    %858 = vmatpush.bf16.msra.mxu0 %v738
    %859 = vmatpush.bf16.msra.mxu0 %v736
    %860 = vmatpush.bf16.msra.mxu0 %v734
    %861 = vmatpush.bf16.msra.mxu0 %v732
    %862 = vmatpush.bf16.msra.mxu0 %v730
    %863 = vmatpush.bf16.msra.mxu0 %v728
    %864 = vmatmul.bf16.gmra.mxu0 %v408
    %v865 = vpop.f32.mrf.mxu0
    %v866 = vadd.f32 %v212, %v865
    %v867 = vpop.f32.mrf.mxu0
    %v868 = vadd.f32 %v212, %v867
    %869 = vmatmul.bf16.gmra.mxu0 %v412
    %v870 = vpop.f32.mrf.mxu0
    %v871 = vadd.f32 %v212, %v870
    %v872 = vpop.f32.mrf.mxu0
    %v873 = vadd.f32 %v212, %v872
    %874 = vmatmul.bf16.gmra.mxu0 %v416
    %v875 = vpop.f32.mrf.mxu0
    %v876 = vadd.f32 %v212, %v875
    %v877 = vpop.f32.mrf.mxu0
    %v878 = vadd.f32 %v212, %v877
    %879 = vmatmul.bf16.gmra.mxu0 %v420
    %v880 = vpop.f32.mrf.mxu0
    %v881 = vadd.f32 %v212, %v880
    %v882 = vpop.f32.mrf.mxu0
    %v883 = vadd.f32 %v212, %v882
    %884 = vmatmul.bf16.gmra.mxu0 %v424
    %v885 = vpop.f32.mrf.mxu0
    %v886 = vadd.f32 %v212, %v885
    %v887 = vpop.f32.mrf.mxu0
    %v888 = vadd.f32 %v212, %v887
    %889 = vmatmul.bf16.gmra.mxu0 %v428
    %v890 = vpop.f32.mrf.mxu0
    %v891 = vadd.f32 %v212, %v890
    %v892 = vpop.f32.mrf.mxu0
    %v893 = vadd.f32 %v212, %v892
    %894 = vmatmul.bf16.gmra.mxu0 %v432
    %v895 = vpop.f32.mrf.mxu0
    %v896 = vadd.f32 %v212, %v895
    %v897 = vpop.f32.mrf.mxu0
    %v898 = vadd.f32 %v212, %v897
    %899 = vmatmul.bf16.gmra.mxu0 %v436
    %v900 = vpop.f32.mrf.mxu0
    %v901 = vadd.f32 %v212, %v900
    %v902 = vpop.f32.mrf.mxu0
    %v903 = vadd.f32 %v212, %v902
    %904 = vmatmul.bf16.gmra.mxu0 %v440
    %v905 = vpop.f32.mrf.mxu0
    %v906 = vadd.f32 %v212, %v905
    %v907 = vpop.f32.mrf.mxu0
    %v908 = vadd.f32 %v212, %v907
    %909 = vmatmul.bf16.gmra.mxu0 %v444
    %v910 = vpop.f32.mrf.mxu0
    %v911 = vadd.f32 %v212, %v910
    %v912 = vpop.f32.mrf.mxu0
    %v913 = vadd.f32 %v212, %v912
    %914 = vmatmul.bf16.gmra.mxu0 %v448
    %v915 = vpop.f32.mrf.mxu0
    %v916 = vadd.f32 %v212, %v915
    %v917 = vpop.f32.mrf.mxu0
    %v918 = vadd.f32 %v212, %v917
    %919 = vmatmul.bf16.gmra.mxu0 %v452
    %v920 = vpop.f32.mrf.mxu0
    %v921 = vadd.f32 %v212, %v920
    %v922 = vpop.f32.mrf.mxu0
    %v923 = vadd.f32 %v212, %v922
    %924 = vmatmul.bf16.gmra.mxu0 %v456
    %v925 = vpop.f32.mrf.mxu0
    %v926 = vadd.f32 %v212, %v925
    %v927 = vpop.f32.mrf.mxu0
    %v928 = vadd.f32 %v212, %v927
    %929 = vmatmul.bf16.gmra.mxu0 %v460
    %v930 = vpop.f32.mrf.mxu0
    %v931 = vadd.f32 %v212, %v930
    %v932 = vpop.f32.mrf.mxu0
    %v933 = vadd.f32 %v212, %v932
    %934 = vmatmul.bf16.gmra.mxu0 %v464
    %v935 = vpop.f32.mrf.mxu0
    %v936 = vadd.f32 %v212, %v935
    %v937 = vpop.f32.mrf.mxu0
    %v938 = vadd.f32 %v212, %v937
    %939 = vmatmul.bf16.gmra.mxu0 %v468
    %v940 = vpop.f32.mrf.mxu0
    %v941 = vadd.f32 %v212, %v940
    %v942 = vpop.f32.mrf.mxu0
    %v943 = vadd.f32 %v212, %v942
    %944 = vdwg.mxu0
    %945 = vmatpush.bf16.msra.mxu0 %v758
    %946 = vmatpush.bf16.msra.mxu0 %v756
    %947 = vmatpush.bf16.msra.mxu0 %v754
    %948 = vmatpush.bf16.msra.mxu0 %v752
    %949 = vmatpush.bf16.msra.mxu0 %v750
    %950 = vmatpush.bf16.msra.mxu0 %v748
    %951 = vmatpush.bf16.msra.mxu0 %v746
    %952 = vmatpush.bf16.msra.mxu0 %v744
    %953 = vmatmul.bf16.gmra.mxu0 %v409
    %v954 = vpop.f32.mrf.mxu0
    %v955 = vadd.f32 %v866, %v954
    %v956 = vpop.f32.mrf.mxu0
    %v957 = vadd.f32 %v868, %v956
    %958 = vmatmul.bf16.gmra.mxu0 %v413
    %v959 = vpop.f32.mrf.mxu0
    %v960 = vadd.f32 %v871, %v959
    %v961 = vpop.f32.mrf.mxu0
    %v962 = vadd.f32 %v873, %v961
    %963 = vmatmul.bf16.gmra.mxu0 %v417
    %v964 = vpop.f32.mrf.mxu0
    %v965 = vadd.f32 %v876, %v964
    %v966 = vpop.f32.mrf.mxu0
    %v967 = vadd.f32 %v878, %v966
    %968 = vmatmul.bf16.gmra.mxu0 %v421
    %v969 = vpop.f32.mrf.mxu0
    %v970 = vadd.f32 %v881, %v969
    %v971 = vpop.f32.mrf.mxu0
    %v972 = vadd.f32 %v883, %v971
    %973 = vmatmul.bf16.gmra.mxu0 %v425
    %v974 = vpop.f32.mrf.mxu0
    %v975 = vadd.f32 %v886, %v974
    %v976 = vpop.f32.mrf.mxu0
    %v977 = vadd.f32 %v888, %v976
    %978 = vmatmul.bf16.gmra.mxu0 %v429
    %v979 = vpop.f32.mrf.mxu0
    %v980 = vadd.f32 %v891, %v979
    %v981 = vpop.f32.mrf.mxu0
    %v982 = vadd.f32 %v893, %v981
    %983 = vmatmul.bf16.gmra.mxu0 %v433
    %v984 = vpop.f32.mrf.mxu0
    %v985 = vadd.f32 %v896, %v984
    %v986 = vpop.f32.mrf.mxu0
    %v987 = vadd.f32 %v898, %v986
    %988 = vmatmul.bf16.gmra.mxu0 %v437
    %v989 = vpop.f32.mrf.mxu0
    %v990 = vadd.f32 %v901, %v989
    %v991 = vpop.f32.mrf.mxu0
    %v992 = vadd.f32 %v903, %v991
    %993 = vmatmul.bf16.gmra.mxu0 %v441
    %v994 = vpop.f32.mrf.mxu0
    %v995 = vadd.f32 %v906, %v994
    %v996 = vpop.f32.mrf.mxu0
    %v997 = vadd.f32 %v908, %v996
    %998 = vmatmul.bf16.gmra.mxu0 %v445
    %v999 = vpop.f32.mrf.mxu0
    %v1000 = vadd.f32 %v911, %v999
    %v1001 = vpop.f32.mrf.mxu0
    %v1002 = vadd.f32 %v913, %v1001
    %1003 = vmatmul.bf16.gmra.mxu0 %v449
    %v1004 = vpop.f32.mrf.mxu0
    %v1005 = vadd.f32 %v916, %v1004
    %v1006 = vpop.f32.mrf.mxu0
    %v1007 = vadd.f32 %v918, %v1006
    %1008 = vmatmul.bf16.gmra.mxu0 %v453
    %v1009 = vpop.f32.mrf.mxu0
    %v1010 = vadd.f32 %v921, %v1009
    %v1011 = vpop.f32.mrf.mxu0
    %v1012 = vadd.f32 %v923, %v1011
    %1013 = vmatmul.bf16.gmra.mxu0 %v457
    %v1014 = vpop.f32.mrf.mxu0
    %v1015 = vadd.f32 %v926, %v1014
    %v1016 = vpop.f32.mrf.mxu0
    %v1017 = vadd.f32 %v928, %v1016
    %1018 = vmatmul.bf16.gmra.mxu0 %v461
    %v1019 = vpop.f32.mrf.mxu0
    %v1020 = vadd.f32 %v931, %v1019
    %v1021 = vpop.f32.mrf.mxu0
    %v1022 = vadd.f32 %v933, %v1021
    %1023 = vmatmul.bf16.gmra.mxu0 %v465
    %v1024 = vpop.f32.mrf.mxu0
    %v1025 = vadd.f32 %v936, %v1024
    %v1026 = vpop.f32.mrf.mxu0
    %v1027 = vadd.f32 %v938, %v1026
    %1028 = vmatmul.bf16.gmra.mxu0 %v469
    %v1029 = vpop.f32.mrf.mxu0
    %v1030 = vadd.f32 %v941, %v1029
    %v1031 = vpop.f32.mrf.mxu0
    %v1032 = vadd.f32 %v943, %v1031
    %1033 = vdwg.mxu0
    %1034 = vmatpush.bf16.msra.mxu0 %v774
    %1035 = vmatpush.bf16.msra.mxu0 %v772
    %1036 = vmatpush.bf16.msra.mxu0 %v770
    %1037 = vmatpush.bf16.msra.mxu0 %v768
    %1038 = vmatpush.bf16.msra.mxu0 %v766
    %1039 = vmatpush.bf16.msra.mxu0 %v764
    %1040 = vmatpush.bf16.msra.mxu0 %v762
    %1041 = vmatpush.bf16.msra.mxu0 %v760
    %1042 = vmatmul.bf16.gmra.mxu0 %v410
    %v1043 = vpop.f32.mrf.mxu0
    %v1044 = vadd.f32 %v955, %v1043
    %v1045 = vpop.f32.mrf.mxu0
    %v1046 = vadd.f32 %v957, %v1045
    %1047 = vmatmul.bf16.gmra.mxu0 %v414
    %v1048 = vpop.f32.mrf.mxu0
    %v1049 = vadd.f32 %v960, %v1048
    %v1050 = vpop.f32.mrf.mxu0
    %v1051 = vadd.f32 %v962, %v1050
    %1052 = vmatmul.bf16.gmra.mxu0 %v418
    %v1053 = vpop.f32.mrf.mxu0
    %v1054 = vadd.f32 %v965, %v1053
    %v1055 = vpop.f32.mrf.mxu0
    %v1056 = vadd.f32 %v967, %v1055
    %1057 = vmatmul.bf16.gmra.mxu0 %v422
    %v1058 = vpop.f32.mrf.mxu0
    %v1059 = vadd.f32 %v970, %v1058
    %v1060 = vpop.f32.mrf.mxu0
    %v1061 = vadd.f32 %v972, %v1060
    %1062 = vmatmul.bf16.gmra.mxu0 %v426
    %v1063 = vpop.f32.mrf.mxu0
    %v1064 = vadd.f32 %v975, %v1063
    %v1065 = vpop.f32.mrf.mxu0
    %v1066 = vadd.f32 %v977, %v1065
    %1067 = vmatmul.bf16.gmra.mxu0 %v430
    %v1068 = vpop.f32.mrf.mxu0
    %v1069 = vadd.f32 %v980, %v1068
    %v1070 = vpop.f32.mrf.mxu0
    %v1071 = vadd.f32 %v982, %v1070
    %1072 = vmatmul.bf16.gmra.mxu0 %v434
    %v1073 = vpop.f32.mrf.mxu0
    %v1074 = vadd.f32 %v985, %v1073
    %v1075 = vpop.f32.mrf.mxu0
    %v1076 = vadd.f32 %v987, %v1075
    %1077 = vmatmul.bf16.gmra.mxu0 %v438
    %v1078 = vpop.f32.mrf.mxu0
    %v1079 = vadd.f32 %v990, %v1078
    %v1080 = vpop.f32.mrf.mxu0
    %v1081 = vadd.f32 %v992, %v1080
    %1082 = vmatmul.bf16.gmra.mxu0 %v442
    %v1083 = vpop.f32.mrf.mxu0
    %v1084 = vadd.f32 %v995, %v1083
    %v1085 = vpop.f32.mrf.mxu0
    %v1086 = vadd.f32 %v997, %v1085
    %1087 = vmatmul.bf16.gmra.mxu0 %v446
    %v1088 = vpop.f32.mrf.mxu0
    %v1089 = vadd.f32 %v1000, %v1088
    %v1090 = vpop.f32.mrf.mxu0
    %v1091 = vadd.f32 %v1002, %v1090
    %1092 = vmatmul.bf16.gmra.mxu0 %v450
    %v1093 = vpop.f32.mrf.mxu0
    %v1094 = vadd.f32 %v1005, %v1093
    %v1095 = vpop.f32.mrf.mxu0
    %v1096 = vadd.f32 %v1007, %v1095
    %1097 = vmatmul.bf16.gmra.mxu0 %v454
    %v1098 = vpop.f32.mrf.mxu0
    %v1099 = vadd.f32 %v1010, %v1098
    %v1100 = vpop.f32.mrf.mxu0
    %v1101 = vadd.f32 %v1012, %v1100
    %1102 = vmatmul.bf16.gmra.mxu0 %v458
    %v1103 = vpop.f32.mrf.mxu0
    %v1104 = vadd.f32 %v1015, %v1103
    %v1105 = vpop.f32.mrf.mxu0
    %v1106 = vadd.f32 %v1017, %v1105
    %1107 = vmatmul.bf16.gmra.mxu0 %v462
    %v1108 = vpop.f32.mrf.mxu0
    %v1109 = vadd.f32 %v1020, %v1108
    %v1110 = vpop.f32.mrf.mxu0
    %v1111 = vadd.f32 %v1022, %v1110
    %1112 = vmatmul.bf16.gmra.mxu0 %v466
    %v1113 = vpop.f32.mrf.mxu0
    %v1114 = vadd.f32 %v1025, %v1113
    %v1115 = vpop.f32.mrf.mxu0
    %v1116 = vadd.f32 %v1027, %v1115
    %1117 = vmatmul.bf16.gmra.mxu0 %v470
    %v1118 = vpop.f32.mrf.mxu0
    %v1119 = vadd.f32 %v1030, %v1118
    %v1120 = vpop.f32.mrf.mxu0
    %v1121 = vadd.f32 %v1032, %v1120
    %1122 = vdwg.mxu0
    %1123 = vmatpush.bf16.msra.mxu0 %v790
    %1124 = vmatpush.bf16.msra.mxu0 %v788
    %1125 = vmatpush.bf16.msra.mxu0 %v786
    %1126 = vmatpush.bf16.msra.mxu0 %v784
    %1127 = vmatpush.bf16.msra.mxu0 %v782
    %1128 = vmatpush.bf16.msra.mxu0 %v780
    %1129 = vmatpush.bf16.msra.mxu0 %v778
    %1130 = vmatpush.bf16.msra.mxu0 %v776
    %1131 = vmatmul.bf16.gmra.mxu0 %v411
    %v1132 = vpop.f32.mrf.mxu0
    %v1133 = vadd.f32 %v1044, %v1132
    %v1134 = vpop.f32.mrf.mxu0
    %v1135 = vadd.f32 %v1046, %v1134
    %1136 = vmatmul.bf16.gmra.mxu0 %v415
    %v1137 = vpop.f32.mrf.mxu0
    %v1138 = vadd.f32 %v1049, %v1137
    %v1139 = vpop.f32.mrf.mxu0
    %v1140 = vadd.f32 %v1051, %v1139
    %1141 = vmatmul.bf16.gmra.mxu0 %v419
    %v1142 = vpop.f32.mrf.mxu0
    %v1143 = vadd.f32 %v1054, %v1142
    %v1144 = vpop.f32.mrf.mxu0
    %v1145 = vadd.f32 %v1056, %v1144
    %1146 = vmatmul.bf16.gmra.mxu0 %v423
    %v1147 = vpop.f32.mrf.mxu0
    %v1148 = vadd.f32 %v1059, %v1147
    %v1149 = vpop.f32.mrf.mxu0
    %v1150 = vadd.f32 %v1061, %v1149
    %1151 = vmatmul.bf16.gmra.mxu0 %v427
    %v1152 = vpop.f32.mrf.mxu0
    %v1153 = vadd.f32 %v1064, %v1152
    %v1154 = vpop.f32.mrf.mxu0
    %v1155 = vadd.f32 %v1066, %v1154
    %1156 = vmatmul.bf16.gmra.mxu0 %v431
    %v1157 = vpop.f32.mrf.mxu0
    %v1158 = vadd.f32 %v1069, %v1157
    %v1159 = vpop.f32.mrf.mxu0
    %v1160 = vadd.f32 %v1071, %v1159
    %1161 = vmatmul.bf16.gmra.mxu0 %v435
    %v1162 = vpop.f32.mrf.mxu0
    %v1163 = vadd.f32 %v1074, %v1162
    %v1164 = vpop.f32.mrf.mxu0
    %v1165 = vadd.f32 %v1076, %v1164
    %1166 = vmatmul.bf16.gmra.mxu0 %v439
    %v1167 = vpop.f32.mrf.mxu0
    %v1168 = vadd.f32 %v1079, %v1167
    %v1169 = vpop.f32.mrf.mxu0
    %v1170 = vadd.f32 %v1081, %v1169
    %1171 = vmatmul.bf16.gmra.mxu0 %v443
    %v1172 = vpop.f32.mrf.mxu0
    %v1173 = vadd.f32 %v1084, %v1172
    %v1174 = vpop.f32.mrf.mxu0
    %v1175 = vadd.f32 %v1086, %v1174
    %1176 = vmatmul.bf16.gmra.mxu0 %v447
    %v1177 = vpop.f32.mrf.mxu0
    %v1178 = vadd.f32 %v1089, %v1177
    %v1179 = vpop.f32.mrf.mxu0
    %v1180 = vadd.f32 %v1091, %v1179
    %1181 = vmatmul.bf16.gmra.mxu0 %v451
    %v1182 = vpop.f32.mrf.mxu0
    %v1183 = vadd.f32 %v1094, %v1182
    %v1184 = vpop.f32.mrf.mxu0
    %v1185 = vadd.f32 %v1096, %v1184
    %1186 = vmatmul.bf16.gmra.mxu0 %v455
    %v1187 = vpop.f32.mrf.mxu0
    %v1188 = vadd.f32 %v1099, %v1187
    %v1189 = vpop.f32.mrf.mxu0
    %v1190 = vadd.f32 %v1101, %v1189
    %1191 = vmatmul.bf16.gmra.mxu0 %v459
    %v1192 = vpop.f32.mrf.mxu0
    %v1193 = vadd.f32 %v1104, %v1192
    %v1194 = vpop.f32.mrf.mxu0
    %v1195 = vadd.f32 %v1106, %v1194
    %1196 = vmatmul.bf16.gmra.mxu0 %v463
    %v1197 = vpop.f32.mrf.mxu0
    %v1198 = vadd.f32 %v1109, %v1197
    %v1199 = vpop.f32.mrf.mxu0
    %v1200 = vadd.f32 %v1111, %v1199
    %1201 = vmatmul.bf16.gmra.mxu0 %v467
    %v1202 = vpop.f32.mrf.mxu0
    %v1203 = vadd.f32 %v1114, %v1202
    %v1204 = vpop.f32.mrf.mxu0
    %v1205 = vadd.f32 %v1116, %v1204
    %1206 = vmatmul.bf16.gmra.mxu0 %v471
    %v1207 = vpop.f32.mrf.mxu0
    %v1208 = vadd.f32 %v1119, %v1207
    %v1209 = vpop.f32.mrf.mxu0
    %v1210 = vadd.f32 %v1121, %v1209
    %1211 = vdwg.mxu0
    %1212 = vmatpush.bf16.msra.mxu0 %v743
    %1213 = vmatpush.bf16.msra.mxu0 %v741
    %1214 = vmatpush.bf16.msra.mxu0 %v739
    %1215 = vmatpush.bf16.msra.mxu0 %v737
    %1216 = vmatpush.bf16.msra.mxu0 %v735
    %1217 = vmatpush.bf16.msra.mxu0 %v733
    %1218 = vmatpush.bf16.msra.mxu0 %v731
    %1219 = vmatpush.bf16.msra.mxu0 %v729
    %1220 = vmatmul.bf16.gmra.mxu0 %v408
    %v1221 = vpop.f32.mrf.mxu0
    %v1222 = vadd.f32 %v213, %v1221
    %v1223 = vpop.f32.mrf.mxu0
    %v1224 = vadd.f32 %v213, %v1223
    %1225 = vmatmul.bf16.gmra.mxu0 %v412
    %v1226 = vpop.f32.mrf.mxu0
    %v1227 = vadd.f32 %v213, %v1226
    %v1228 = vpop.f32.mrf.mxu0
    %v1229 = vadd.f32 %v213, %v1228
    %1230 = vmatmul.bf16.gmra.mxu0 %v416
    %v1231 = vpop.f32.mrf.mxu0
    %v1232 = vadd.f32 %v213, %v1231
    %v1233 = vpop.f32.mrf.mxu0
    %v1234 = vadd.f32 %v213, %v1233
    %1235 = vmatmul.bf16.gmra.mxu0 %v420
    %v1236 = vpop.f32.mrf.mxu0
    %v1237 = vadd.f32 %v213, %v1236
    %v1238 = vpop.f32.mrf.mxu0
    %v1239 = vadd.f32 %v213, %v1238
    %1240 = vmatmul.bf16.gmra.mxu0 %v424
    %v1241 = vpop.f32.mrf.mxu0
    %v1242 = vadd.f32 %v213, %v1241
    %v1243 = vpop.f32.mrf.mxu0
    %v1244 = vadd.f32 %v213, %v1243
    %1245 = vmatmul.bf16.gmra.mxu0 %v428
    %v1246 = vpop.f32.mrf.mxu0
    %v1247 = vadd.f32 %v213, %v1246
    %v1248 = vpop.f32.mrf.mxu0
    %v1249 = vadd.f32 %v213, %v1248
    %1250 = vmatmul.bf16.gmra.mxu0 %v432
    %v1251 = vpop.f32.mrf.mxu0
    %v1252 = vadd.f32 %v213, %v1251
    %v1253 = vpop.f32.mrf.mxu0
    %v1254 = vadd.f32 %v213, %v1253
    %1255 = vmatmul.bf16.gmra.mxu0 %v436
    %v1256 = vpop.f32.mrf.mxu0
    %v1257 = vadd.f32 %v213, %v1256
    %v1258 = vpop.f32.mrf.mxu0
    %v1259 = vadd.f32 %v213, %v1258
    %1260 = vmatmul.bf16.gmra.mxu0 %v440
    %v1261 = vpop.f32.mrf.mxu0
    %v1262 = vadd.f32 %v213, %v1261
    %v1263 = vpop.f32.mrf.mxu0
    %v1264 = vadd.f32 %v213, %v1263
    %1265 = vmatmul.bf16.gmra.mxu0 %v444
    %v1266 = vpop.f32.mrf.mxu0
    %v1267 = vadd.f32 %v213, %v1266
    %v1268 = vpop.f32.mrf.mxu0
    %v1269 = vadd.f32 %v213, %v1268
    %1270 = vmatmul.bf16.gmra.mxu0 %v448
    %v1271 = vpop.f32.mrf.mxu0
    %v1272 = vadd.f32 %v213, %v1271
    %v1273 = vpop.f32.mrf.mxu0
    %v1274 = vadd.f32 %v213, %v1273
    %1275 = vmatmul.bf16.gmra.mxu0 %v452
    %v1276 = vpop.f32.mrf.mxu0
    %v1277 = vadd.f32 %v213, %v1276
    %v1278 = vpop.f32.mrf.mxu0
    %v1279 = vadd.f32 %v213, %v1278
    %1280 = vmatmul.bf16.gmra.mxu0 %v456
    %v1281 = vpop.f32.mrf.mxu0
    %v1282 = vadd.f32 %v213, %v1281
    %v1283 = vpop.f32.mrf.mxu0
    %v1284 = vadd.f32 %v213, %v1283
    %1285 = vmatmul.bf16.gmra.mxu0 %v460
    %v1286 = vpop.f32.mrf.mxu0
    %v1287 = vadd.f32 %v213, %v1286
    %v1288 = vpop.f32.mrf.mxu0
    %v1289 = vadd.f32 %v213, %v1288
    %1290 = vmatmul.bf16.gmra.mxu0 %v464
    %v1291 = vpop.f32.mrf.mxu0
    %v1292 = vadd.f32 %v213, %v1291
    %v1293 = vpop.f32.mrf.mxu0
    %v1294 = vadd.f32 %v213, %v1293
    %1295 = vmatmul.bf16.gmra.mxu0 %v468
    %v1296 = vpop.f32.mrf.mxu0
    %v1297 = vadd.f32 %v213, %v1296
    %v1298 = vpop.f32.mrf.mxu0
    %v1299 = vadd.f32 %v213, %v1298
    %1300 = vdwg.mxu0
    %1301 = vmatpush.bf16.msra.mxu0 %v759
    %1302 = vmatpush.bf16.msra.mxu0 %v757
    %1303 = vmatpush.bf16.msra.mxu0 %v755
    %1304 = vmatpush.bf16.msra.mxu0 %v753
    %1305 = vmatpush.bf16.msra.mxu0 %v751
    %1306 = vmatpush.bf16.msra.mxu0 %v749
    %1307 = vmatpush.bf16.msra.mxu0 %v747
    %1308 = vmatpush.bf16.msra.mxu0 %v745
    %1309 = vmatmul.bf16.gmra.mxu0 %v409
    %v1310 = vpop.f32.mrf.mxu0
    %v1311 = vadd.f32 %v1222, %v1310
    %v1312 = vpop.f32.mrf.mxu0
    %v1313 = vadd.f32 %v1224, %v1312
    %1314 = vmatmul.bf16.gmra.mxu0 %v413
    %v1315 = vpop.f32.mrf.mxu0
    %v1316 = vadd.f32 %v1227, %v1315
    %v1317 = vpop.f32.mrf.mxu0
    %v1318 = vadd.f32 %v1229, %v1317
    %1319 = vmatmul.bf16.gmra.mxu0 %v417
    %v1320 = vpop.f32.mrf.mxu0
    %v1321 = vadd.f32 %v1232, %v1320
    %v1322 = vpop.f32.mrf.mxu0
    %v1323 = vadd.f32 %v1234, %v1322
    %1324 = vmatmul.bf16.gmra.mxu0 %v421
    %v1325 = vpop.f32.mrf.mxu0
    %v1326 = vadd.f32 %v1237, %v1325
    %v1327 = vpop.f32.mrf.mxu0
    %v1328 = vadd.f32 %v1239, %v1327
    %1329 = vmatmul.bf16.gmra.mxu0 %v425
    %v1330 = vpop.f32.mrf.mxu0
    %v1331 = vadd.f32 %v1242, %v1330
    %v1332 = vpop.f32.mrf.mxu0
    %v1333 = vadd.f32 %v1244, %v1332
    %1334 = vmatmul.bf16.gmra.mxu0 %v429
    %v1335 = vpop.f32.mrf.mxu0
    %v1336 = vadd.f32 %v1247, %v1335
    %v1337 = vpop.f32.mrf.mxu0
    %v1338 = vadd.f32 %v1249, %v1337
    %1339 = vmatmul.bf16.gmra.mxu0 %v433
    %v1340 = vpop.f32.mrf.mxu0
    %v1341 = vadd.f32 %v1252, %v1340
    %v1342 = vpop.f32.mrf.mxu0
    %v1343 = vadd.f32 %v1254, %v1342
    %1344 = vmatmul.bf16.gmra.mxu0 %v437
    %v1345 = vpop.f32.mrf.mxu0
    %v1346 = vadd.f32 %v1257, %v1345
    %v1347 = vpop.f32.mrf.mxu0
    %v1348 = vadd.f32 %v1259, %v1347
    %1349 = vmatmul.bf16.gmra.mxu0 %v441
    %v1350 = vpop.f32.mrf.mxu0
    %v1351 = vadd.f32 %v1262, %v1350
    %v1352 = vpop.f32.mrf.mxu0
    %v1353 = vadd.f32 %v1264, %v1352
    %1354 = vmatmul.bf16.gmra.mxu0 %v445
    %v1355 = vpop.f32.mrf.mxu0
    %v1356 = vadd.f32 %v1267, %v1355
    %v1357 = vpop.f32.mrf.mxu0
    %v1358 = vadd.f32 %v1269, %v1357
    %1359 = vmatmul.bf16.gmra.mxu0 %v449
    %v1360 = vpop.f32.mrf.mxu0
    %v1361 = vadd.f32 %v1272, %v1360
    %v1362 = vpop.f32.mrf.mxu0
    %v1363 = vadd.f32 %v1274, %v1362
    %1364 = vmatmul.bf16.gmra.mxu0 %v453
    %v1365 = vpop.f32.mrf.mxu0
    %v1366 = vadd.f32 %v1277, %v1365
    %v1367 = vpop.f32.mrf.mxu0
    %v1368 = vadd.f32 %v1279, %v1367
    %1369 = vmatmul.bf16.gmra.mxu0 %v457
    %v1370 = vpop.f32.mrf.mxu0
    %v1371 = vadd.f32 %v1282, %v1370
    %v1372 = vpop.f32.mrf.mxu0
    %v1373 = vadd.f32 %v1284, %v1372
    %1374 = vmatmul.bf16.gmra.mxu0 %v461
    %v1375 = vpop.f32.mrf.mxu0
    %v1376 = vadd.f32 %v1287, %v1375
    %v1377 = vpop.f32.mrf.mxu0
    %v1378 = vadd.f32 %v1289, %v1377
    %1379 = vmatmul.bf16.gmra.mxu0 %v465
    %v1380 = vpop.f32.mrf.mxu0
    %v1381 = vadd.f32 %v1292, %v1380
    %v1382 = vpop.f32.mrf.mxu0
    %v1383 = vadd.f32 %v1294, %v1382
    %1384 = vmatmul.bf16.gmra.mxu0 %v469
    %v1385 = vpop.f32.mrf.mxu0
    %v1386 = vadd.f32 %v1297, %v1385
    %v1387 = vpop.f32.mrf.mxu0
    %v1388 = vadd.f32 %v1299, %v1387
    %1389 = vdwg.mxu0
    %1390 = vmatpush.bf16.msra.mxu0 %v775
    %1391 = vmatpush.bf16.msra.mxu0 %v773
    %1392 = vmatpush.bf16.msra.mxu0 %v771
    %1393 = vmatpush.bf16.msra.mxu0 %v769
    %1394 = vmatpush.bf16.msra.mxu0 %v767
    %1395 = vmatpush.bf16.msra.mxu0 %v765
    %1396 = vmatpush.bf16.msra.mxu0 %v763
    %1397 = vmatpush.bf16.msra.mxu0 %v761
    %1398 = vmatmul.bf16.gmra.mxu0 %v410
    %v1399 = vpop.f32.mrf.mxu0
    %v1400 = vadd.f32 %v1311, %v1399
    %v1401 = vpop.f32.mrf.mxu0
    %v1402 = vadd.f32 %v1313, %v1401
    %1403 = vmatmul.bf16.gmra.mxu0 %v414
    %v1404 = vpop.f32.mrf.mxu0
    %v1405 = vadd.f32 %v1316, %v1404
    %v1406 = vpop.f32.mrf.mxu0
    %v1407 = vadd.f32 %v1318, %v1406
    %1408 = vmatmul.bf16.gmra.mxu0 %v418
    %v1409 = vpop.f32.mrf.mxu0
    %v1410 = vadd.f32 %v1321, %v1409
    %v1411 = vpop.f32.mrf.mxu0
    %v1412 = vadd.f32 %v1323, %v1411
    %1413 = vmatmul.bf16.gmra.mxu0 %v422
    %v1414 = vpop.f32.mrf.mxu0
    %v1415 = vadd.f32 %v1326, %v1414
    %v1416 = vpop.f32.mrf.mxu0
    %v1417 = vadd.f32 %v1328, %v1416
    %1418 = vmatmul.bf16.gmra.mxu0 %v426
    %v1419 = vpop.f32.mrf.mxu0
    %v1420 = vadd.f32 %v1331, %v1419
    %v1421 = vpop.f32.mrf.mxu0
    %v1422 = vadd.f32 %v1333, %v1421
    %1423 = vmatmul.bf16.gmra.mxu0 %v430
    %v1424 = vpop.f32.mrf.mxu0
    %v1425 = vadd.f32 %v1336, %v1424
    %v1426 = vpop.f32.mrf.mxu0
    %v1427 = vadd.f32 %v1338, %v1426
    %1428 = vmatmul.bf16.gmra.mxu0 %v434
    %v1429 = vpop.f32.mrf.mxu0
    %v1430 = vadd.f32 %v1341, %v1429
    %v1431 = vpop.f32.mrf.mxu0
    %v1432 = vadd.f32 %v1343, %v1431
    %1433 = vmatmul.bf16.gmra.mxu0 %v438
    %v1434 = vpop.f32.mrf.mxu0
    %v1435 = vadd.f32 %v1346, %v1434
    %v1436 = vpop.f32.mrf.mxu0
    %v1437 = vadd.f32 %v1348, %v1436
    %1438 = vmatmul.bf16.gmra.mxu0 %v442
    %v1439 = vpop.f32.mrf.mxu0
    %v1440 = vadd.f32 %v1351, %v1439
    %v1441 = vpop.f32.mrf.mxu0
    %v1442 = vadd.f32 %v1353, %v1441
    %1443 = vmatmul.bf16.gmra.mxu0 %v446
    %v1444 = vpop.f32.mrf.mxu0
    %v1445 = vadd.f32 %v1356, %v1444
    %v1446 = vpop.f32.mrf.mxu0
    %v1447 = vadd.f32 %v1358, %v1446
    %1448 = vmatmul.bf16.gmra.mxu0 %v450
    %v1449 = vpop.f32.mrf.mxu0
    %v1450 = vadd.f32 %v1361, %v1449
    %v1451 = vpop.f32.mrf.mxu0
    %v1452 = vadd.f32 %v1363, %v1451
    %1453 = vmatmul.bf16.gmra.mxu0 %v454
    %v1454 = vpop.f32.mrf.mxu0
    %v1455 = vadd.f32 %v1366, %v1454
    %v1456 = vpop.f32.mrf.mxu0
    %v1457 = vadd.f32 %v1368, %v1456
    %1458 = vmatmul.bf16.gmra.mxu0 %v458
    %v1459 = vpop.f32.mrf.mxu0
    %v1460 = vadd.f32 %v1371, %v1459
    %v1461 = vpop.f32.mrf.mxu0
    %v1462 = vadd.f32 %v1373, %v1461
    %1463 = vmatmul.bf16.gmra.mxu0 %v462
    %v1464 = vpop.f32.mrf.mxu0
    %v1465 = vadd.f32 %v1376, %v1464
    %v1466 = vpop.f32.mrf.mxu0
    %v1467 = vadd.f32 %v1378, %v1466
    %1468 = vmatmul.bf16.gmra.mxu0 %v466
    %v1469 = vpop.f32.mrf.mxu0
    %v1470 = vadd.f32 %v1381, %v1469
    %v1471 = vpop.f32.mrf.mxu0
    %v1472 = vadd.f32 %v1383, %v1471
    %1473 = vmatmul.bf16.gmra.mxu0 %v470
    %v1474 = vpop.f32.mrf.mxu0
    %v1475 = vadd.f32 %v1386, %v1474
    %v1476 = vpop.f32.mrf.mxu0
    %v1477 = vadd.f32 %v1388, %v1476
    %1478 = vdwg.mxu0
    %1479 = vmatpush.bf16.msra.mxu0 %v791
    %1480 = vmatpush.bf16.msra.mxu0 %v789
    %1481 = vmatpush.bf16.msra.mxu0 %v787
    %1482 = vmatpush.bf16.msra.mxu0 %v785
    %1483 = vmatpush.bf16.msra.mxu0 %v783
    %1484 = vmatpush.bf16.msra.mxu0 %v781
    %1485 = vmatpush.bf16.msra.mxu0 %v779
    %1486 = vmatpush.bf16.msra.mxu0 %v777
    %1487 = vmatmul.bf16.gmra.mxu0 %v411
    %v1488 = vpop.f32.mrf.mxu0
    %v1489 = vadd.f32 %v1400, %v1488
    %v1490 = vpop.f32.mrf.mxu0
    %v1491 = vadd.f32 %v1402, %v1490
    %1492 = vmatmul.bf16.gmra.mxu0 %v415
    %v1493 = vpop.f32.mrf.mxu0
    %v1494 = vadd.f32 %v1405, %v1493
    %v1495 = vpop.f32.mrf.mxu0
    %v1496 = vadd.f32 %v1407, %v1495
    %1497 = vmatmul.bf16.gmra.mxu0 %v419
    %v1498 = vpop.f32.mrf.mxu0
    %v1499 = vadd.f32 %v1410, %v1498
    %v1500 = vpop.f32.mrf.mxu0
    %v1501 = vadd.f32 %v1412, %v1500
    %1502 = vmatmul.bf16.gmra.mxu0 %v423
    %v1503 = vpop.f32.mrf.mxu0
    %v1504 = vadd.f32 %v1415, %v1503
    %v1505 = vpop.f32.mrf.mxu0
    %v1506 = vadd.f32 %v1417, %v1505
    %1507 = vmatmul.bf16.gmra.mxu0 %v427
    %v1508 = vpop.f32.mrf.mxu0
    %v1509 = vadd.f32 %v1420, %v1508
    %v1510 = vpop.f32.mrf.mxu0
    %v1511 = vadd.f32 %v1422, %v1510
    %1512 = vmatmul.bf16.gmra.mxu0 %v431
    %v1513 = vpop.f32.mrf.mxu0
    %v1514 = vadd.f32 %v1425, %v1513
    %v1515 = vpop.f32.mrf.mxu0
    %v1516 = vadd.f32 %v1427, %v1515
    %1517 = vmatmul.bf16.gmra.mxu0 %v435
    %v1518 = vpop.f32.mrf.mxu0
    %v1519 = vadd.f32 %v1430, %v1518
    %v1520 = vpop.f32.mrf.mxu0
    %v1521 = vadd.f32 %v1432, %v1520
    %1522 = vmatmul.bf16.gmra.mxu0 %v439
    %v1523 = vpop.f32.mrf.mxu0
    %v1524 = vadd.f32 %v1435, %v1523
    %v1525 = vpop.f32.mrf.mxu0
    %v1526 = vadd.f32 %v1437, %v1525
    %1527 = vmatmul.bf16.gmra.mxu0 %v443
    %v1528 = vpop.f32.mrf.mxu0
    %v1529 = vadd.f32 %v1440, %v1528
    %v1530 = vpop.f32.mrf.mxu0
    %v1531 = vadd.f32 %v1442, %v1530
    %1532 = vmatmul.bf16.gmra.mxu0 %v447
    %v1533 = vpop.f32.mrf.mxu0
    %v1534 = vadd.f32 %v1445, %v1533
    %v1535 = vpop.f32.mrf.mxu0
    %v1536 = vadd.f32 %v1447, %v1535
    %1537 = vmatmul.bf16.gmra.mxu0 %v451
    %v1538 = vpop.f32.mrf.mxu0
    %v1539 = vadd.f32 %v1450, %v1538
    %v1540 = vpop.f32.mrf.mxu0
    %v1541 = vadd.f32 %v1452, %v1540
    %1542 = vmatmul.bf16.gmra.mxu0 %v455
    %v1543 = vpop.f32.mrf.mxu0
    %v1544 = vadd.f32 %v1455, %v1543
    %v1545 = vpop.f32.mrf.mxu0
    %v1546 = vadd.f32 %v1457, %v1545
    %1547 = vmatmul.bf16.gmra.mxu0 %v459
    %v1548 = vpop.f32.mrf.mxu0
    %v1549 = vadd.f32 %v1460, %v1548
    %v1550 = vpop.f32.mrf.mxu0
    %v1551 = vadd.f32 %v1462, %v1550
    %1552 = vmatmul.bf16.gmra.mxu0 %v463
    %v1553 = vpop.f32.mrf.mxu0
    %v1554 = vadd.f32 %v1465, %v1553
    %v1555 = vpop.f32.mrf.mxu0
    %v1556 = vadd.f32 %v1467, %v1555
    %1557 = vmatmul.bf16.gmra.mxu0 %v467
    %v1558 = vpop.f32.mrf.mxu0
    %v1559 = vadd.f32 %v1470, %v1558
    %v1560 = vpop.f32.mrf.mxu0
    %v1561 = vadd.f32 %v1472, %v1560
    %1562 = vmatmul.bf16.gmra.mxu0 %v471
    %v1563 = vpop.f32.mrf.mxu0
    %v1564 = vadd.f32 %v1475, %v1563
    %v1565 = vpop.f32.mrf.mxu0
    %v1566 = vadd.f32 %v1477, %v1565
    %1567 = vdwg.mxu0
    %v1568 = vmax.f32 %v1133, 0.0
    %v1569 = vmax.f32 %v1489, 0.0
    %v1570 = vmax.f32 %v1135, 0.0
    %v1571 = vmax.f32 %v1491, 0.0
    %v1572 = vmax.f32 %v1138, 0.0
    %v1573 = vmax.f32 %v1494, 0.0
    %v1574 = vmax.f32 %v1140, 0.0
    %v1575 = vmax.f32 %v1496, 0.0
    %v1576 = vmax.f32 %v1143, 0.0
    %v1577 = vmax.f32 %v1499, 0.0
    %v1578 = vmax.f32 %v1145, 0.0
    %v1579 = vmax.f32 %v1501, 0.0
    %v1580 = vmax.f32 %v1148, 0.0
    %v1581 = vmax.f32 %v1504, 0.0
    %v1582 = vmax.f32 %v1150, 0.0
    %v1583 = vmax.f32 %v1506, 0.0
    %v1584 = vmax.f32 %v1153, 0.0
    %v1585 = vmax.f32 %v1509, 0.0
    %v1586 = vmax.f32 %v1155, 0.0
    %v1587 = vmax.f32 %v1511, 0.0
    %v1588 = vmax.f32 %v1158, 0.0
    %v1589 = vmax.f32 %v1514, 0.0
    %v1590 = vmax.f32 %v1160, 0.0
    %v1591 = vmax.f32 %v1516, 0.0
    %v1592 = vmax.f32 %v1163, 0.0
    %v1593 = vmax.f32 %v1519, 0.0
    %v1594 = vmax.f32 %v1165, 0.0
    %v1595 = vmax.f32 %v1521, 0.0
    %v1596 = vmax.f32 %v1168, 0.0
    %v1597 = vmax.f32 %v1524, 0.0
    %v1598 = vmax.f32 %v1170, 0.0
    %v1599 = vmax.f32 %v1526, 0.0
    %v1600 = vmax.f32 %v1173, 0.0
    %v1601 = vmax.f32 %v1529, 0.0
    %v1602 = vmax.f32 %v1175, 0.0
    %v1603 = vmax.f32 %v1531, 0.0
    %v1604 = vmax.f32 %v1178, 0.0
    %v1605 = vmax.f32 %v1534, 0.0
    %v1606 = vmax.f32 %v1180, 0.0
    %v1607 = vmax.f32 %v1536, 0.0
    %v1608 = vmax.f32 %v1183, 0.0
    %v1609 = vmax.f32 %v1539, 0.0
    %v1610 = vmax.f32 %v1185, 0.0
    %v1611 = vmax.f32 %v1541, 0.0
    %v1612 = vmax.f32 %v1188, 0.0
    %v1613 = vmax.f32 %v1544, 0.0
    %v1614 = vmax.f32 %v1190, 0.0
    %v1615 = vmax.f32 %v1546, 0.0
    %v1616 = vmax.f32 %v1193, 0.0
    %v1617 = vmax.f32 %v1549, 0.0
    %v1618 = vmax.f32 %v1195, 0.0
    %v1619 = vmax.f32 %v1551, 0.0
    %v1620 = vmax.f32 %v1198, 0.0
    %v1621 = vmax.f32 %v1554, 0.0
    %v1622 = vmax.f32 %v1200, 0.0
    %v1623 = vmax.f32 %v1556, 0.0
    %v1624 = vmax.f32 %v1203, 0.0
    %v1625 = vmax.f32 %v1559, 0.0
    %v1626 = vmax.f32 %v1205, 0.0
    %v1627 = vmax.f32 %v1561, 0.0
    %v1628 = vmax.f32 %v1208, 0.0
    %v1629 = vmax.f32 %v1564, 0.0
    %v1630 = vmax.f32 %v1210, 0.0
    %v1631 = vmax.f32 %v1566, 0.0
    %v1632 = vpack.c.bf16 %v1570, %v1568
    %v1633 = vpack.c.bf16 %v1571, %v1569
    %v1634 = vpack.c.bf16 %v1574, %v1572
    %v1635 = vpack.c.bf16 %v1575, %v1573
    %v1636 = vpack.c.bf16 %v1578, %v1576
    %v1637 = vpack.c.bf16 %v1579, %v1577
    %v1638 = vpack.c.bf16 %v1582, %v1580
    %v1639 = vpack.c.bf16 %v1583, %v1581
    %v1640 = vpack.c.bf16 %v1586, %v1584
    %v1641 = vpack.c.bf16 %v1587, %v1585
    %v1642 = vpack.c.bf16 %v1590, %v1588
    %v1643 = vpack.c.bf16 %v1591, %v1589
    %v1644 = vpack.c.bf16 %v1594, %v1592
    %v1645 = vpack.c.bf16 %v1595, %v1593
    %v1646 = vpack.c.bf16 %v1598, %v1596
    %v1647 = vpack.c.bf16 %v1599, %v1597
    %v1648 = vpack.c.bf16 %v1602, %v1600
    %v1649 = vpack.c.bf16 %v1603, %v1601
    %v1650 = vpack.c.bf16 %v1606, %v1604
    %v1651 = vpack.c.bf16 %v1607, %v1605
    %v1652 = vpack.c.bf16 %v1610, %v1608
    %v1653 = vpack.c.bf16 %v1611, %v1609
    %v1654 = vpack.c.bf16 %v1614, %v1612
    %v1655 = vpack.c.bf16 %v1615, %v1613
    %v1656 = vpack.c.bf16 %v1618, %v1616
    %v1657 = vpack.c.bf16 %v1619, %v1617
    %v1658 = vpack.c.bf16 %v1622, %v1620
    %v1659 = vpack.c.bf16 %v1623, %v1621
    %v1660 = vpack.c.bf16 %v1626, %v1624
    %v1661 = vpack.c.bf16 %v1627, %v1625
    %v1662 = vpack.c.bf16 %v1630, %v1628
    %v1663 = vpack.c.bf16 %v1631, %v1629
    %v1664 = vld [vmem:[#allocation8] sm:$0xf]
    %v1665 = vld [vmem:[#allocation8 + $0x4] sm:$0xf]
    %v1666 = vld [vmem:[#allocation8 + $0x8] sm:$0xf]
    %v1667 = vld [vmem:[#allocation8 + $0xc] sm:$0xf]
    %v1668 = vld [vmem:[#allocation8 + $0x10] sm:$0xf]
    %v1669 = vld [vmem:[#allocation8 + $0x14] sm:$0xf]
    %v1670 = vld [vmem:[#allocation8 + $0x18] sm:$0xf]
    %v1671 = vld [vmem:[#allocation8 + $0x1c] sm:$0xf]
    %v1672 = vld [vmem:[#allocation8 + $0x20] sm:$0xf]
    %v1673 = vld [vmem:[#allocation8 + $0x24] sm:$0xf]
    %v1674 = vld [vmem:[#allocation8 + $0x28] sm:$0xf]
    %v1675 = vld [vmem:[#allocation8 + $0x2c] sm:$0xf]
    %v1676 = vld [vmem:[#allocation8 + $0x30] sm:$0xf]
    %v1677 = vld [vmem:[#allocation8 + $0x34] sm:$0xf]
    %v1678 = vld [vmem:[#allocation8 + $0x38] sm:$0xf]
    %v1679 = vld [vmem:[#allocation8 + $0x3c] sm:$0xf]
    %v1680 = vld [vmem:[#allocation8 + $0x40] sm:$0xf]
    %v1681 = vld [vmem:[#allocation8 + $0x44] sm:$0xf]
    %v1682 = vld [vmem:[#allocation8 + $0x48] sm:$0xf]
    %v1683 = vld [vmem:[#allocation8 + $0x4c] sm:$0xf]
    %v1684 = vld [vmem:[#allocation8 + $0x50] sm:$0xf]
    %v1685 = vld [vmem:[#allocation8 + $0x54] sm:$0xf]
    %v1686 = vld [vmem:[#allocation8 + $0x58] sm:$0xf]
    %v1687 = vld [vmem:[#allocation8 + $0x5c] sm:$0xf]
    %v1688 = vld [vmem:[#allocation8 + $0x60] sm:$0xf]
    %v1689 = vld [vmem:[#allocation8 + $0x64] sm:$0xf]
    %v1690 = vld [vmem:[#allocation8 + $0x68] sm:$0xf]
    %v1691 = vld [vmem:[#allocation8 + $0x6c] sm:$0xf]
    %v1692 = vld [vmem:[#allocation8 + $0x70] sm:$0xf]
    %v1693 = vld [vmem:[#allocation8 + $0x74] sm:$0xf]
    %v1694 = vld [vmem:[#allocation8 + $0x78] sm:$0xf]
    %v1695 = vld [vmem:[#allocation8 + $0x7c] sm:$0xf]
    %v1696 = vld [vmem:[%s4] sm:$0x1]
    %v1698 = vperm.slane %v1696, 0
    %v1732 = vunpack.c.l.b16 %v1664
    %v1733 = vunpack.c.l.b16 %v1665
    %v1734 = vunpack.c.l.b16 %v1666
    %v1735 = vunpack.c.l.b16 %v1667
    %v1736 = vunpack.c.l.b16 %v1668
    %v1737 = vunpack.c.l.b16 %v1669
    %v1738 = vunpack.c.l.b16 %v1670
    %v1739 = vunpack.c.l.b16 %v1671
    %v1740 = vunpack.c.l.b16 %v1672
    %v1741 = vunpack.c.l.b16 %v1673
    %v1742 = vunpack.c.l.b16 %v1674
    %v1743 = vunpack.c.l.b16 %v1675
    %v1744 = vunpack.c.l.b16 %v1676
    %v1745 = vunpack.c.l.b16 %v1677
    %v1746 = vunpack.c.l.b16 %v1678
    %v1747 = vunpack.c.l.b16 %v1679
    %v1748 = vunpack.c.l.b16 %v1680
    %v1749 = vunpack.c.l.b16 %v1681
    %v1750 = vunpack.c.l.b16 %v1682
    %v1751 = vunpack.c.l.b16 %v1683
    %v1752 = vunpack.c.l.b16 %v1684
    %v1753 = vunpack.c.l.b16 %v1685
    %v1754 = vunpack.c.l.b16 %v1686
    %v1755 = vunpack.c.l.b16 %v1687
    %v1756 = vunpack.c.l.b16 %v1688
    %v1757 = vunpack.c.l.b16 %v1689
    %v1758 = vunpack.c.l.b16 %v1690
    %v1759 = vunpack.c.l.b16 %v1691
    %v1760 = vunpack.c.l.b16 %v1692
    %v1761 = vunpack.c.l.b16 %v1693
    %v1762 = vunpack.c.l.b16 %v1694
    %v1763 = vunpack.c.l.b16 %v1695
    %v1764 = vpack.c.b16 %v1733, %v1732
    %v1765 = vpack.c.b16 %v1735, %v1734
    %v1766 = vpack.c.b16 %v1737, %v1736
    %v1767 = vpack.c.b16 %v1739, %v1738
    %v1768 = vpack.c.b16 %v1741, %v1740
    %v1769 = vpack.c.b16 %v1743, %v1742
    %v1770 = vpack.c.b16 %v1745, %v1744
    %v1771 = vpack.c.b16 %v1747, %v1746
    %v1772 = vpack.c.b16 %v1749, %v1748
    %v1773 = vpack.c.b16 %v1751, %v1750
    %v1774 = vpack.c.b16 %v1753, %v1752
    %v1775 = vpack.c.b16 %v1755, %v1754
    %v1776 = vpack.c.b16 %v1757, %v1756
    %v1777 = vpack.c.b16 %v1759, %v1758
    %v1778 = vpack.c.b16 %v1761, %v1760
    %v1779 = vpack.c.b16 %v1763, %v1762
    %1796 = vmatpush.bf16.msra.mxu0 %v1771
    %1797 = vmatpush.bf16.msra.mxu0 %v1770
    %1798 = vmatpush.bf16.msra.mxu0 %v1769
    %1799 = vmatpush.bf16.msra.mxu0 %v1768
    %1800 = vmatpush.bf16.msra.mxu0 %v1767
    %1801 = vmatpush.bf16.msra.mxu0 %v1766
    %1802 = vmatpush.bf16.msra.mxu0 %v1765
    %1803 = vmatpush.bf16.msra.mxu0 %v1764
    %1804 = vmatmul.bf16.gmra.mxu0 %v1632
    %v1805 = vpop.f32.mrf.mxu0
    %v1806 = vadd.f32 %v1698, %v1805
    %v1807 = vpop.f32.mrf.mxu0
    %v1808 = vadd.f32 %v1698, %v1807
    %1809 = vmatmul.bf16.gmra.mxu0 %v1634
    %v1810 = vpop.f32.mrf.mxu0
    %v1811 = vadd.f32 %v1698, %v1810
    %v1812 = vpop.f32.mrf.mxu0
    %v1813 = vadd.f32 %v1698, %v1812
    %1814 = vmatmul.bf16.gmra.mxu0 %v1636
    %v1815 = vpop.f32.mrf.mxu0
    %v1816 = vadd.f32 %v1698, %v1815
    %v1817 = vpop.f32.mrf.mxu0
    %v1818 = vadd.f32 %v1698, %v1817
    %1819 = vmatmul.bf16.gmra.mxu0 %v1638
    %v1820 = vpop.f32.mrf.mxu0
    %v1821 = vadd.f32 %v1698, %v1820
    %v1822 = vpop.f32.mrf.mxu0
    %v1823 = vadd.f32 %v1698, %v1822
    %1824 = vmatmul.bf16.gmra.mxu0 %v1640
    %v1825 = vpop.f32.mrf.mxu0
    %v1826 = vadd.f32 %v1698, %v1825
    %v1827 = vpop.f32.mrf.mxu0
    %v1828 = vadd.f32 %v1698, %v1827
    %1829 = vmatmul.bf16.gmra.mxu0 %v1642
    %v1830 = vpop.f32.mrf.mxu0
    %v1831 = vadd.f32 %v1698, %v1830
    %v1832 = vpop.f32.mrf.mxu0
    %v1833 = vadd.f32 %v1698, %v1832
    %1834 = vmatmul.bf16.gmra.mxu0 %v1644
    %v1835 = vpop.f32.mrf.mxu0
    %v1836 = vadd.f32 %v1698, %v1835
    %v1837 = vpop.f32.mrf.mxu0
    %v1838 = vadd.f32 %v1698, %v1837
    %1839 = vmatmul.bf16.gmra.mxu0 %v1646
    %v1840 = vpop.f32.mrf.mxu0
    %v1841 = vadd.f32 %v1698, %v1840
    %v1842 = vpop.f32.mrf.mxu0
    %v1843 = vadd.f32 %v1698, %v1842
    %1844 = vmatmul.bf16.gmra.mxu0 %v1648
    %v1845 = vpop.f32.mrf.mxu0
    %v1846 = vadd.f32 %v1698, %v1845
    %v1847 = vpop.f32.mrf.mxu0
    %v1848 = vadd.f32 %v1698, %v1847
    %1849 = vmatmul.bf16.gmra.mxu0 %v1650
    %v1850 = vpop.f32.mrf.mxu0
    %v1851 = vadd.f32 %v1698, %v1850
    %v1852 = vpop.f32.mrf.mxu0
    %v1853 = vadd.f32 %v1698, %v1852
    %1854 = vmatmul.bf16.gmra.mxu0 %v1652
    %v1855 = vpop.f32.mrf.mxu0
    %v1856 = vadd.f32 %v1698, %v1855
    %v1857 = vpop.f32.mrf.mxu0
    %v1858 = vadd.f32 %v1698, %v1857
    %1859 = vmatmul.bf16.gmra.mxu0 %v1654
    %v1860 = vpop.f32.mrf.mxu0
    %v1861 = vadd.f32 %v1698, %v1860
    %v1862 = vpop.f32.mrf.mxu0
    %v1863 = vadd.f32 %v1698, %v1862
    %1864 = vmatmul.bf16.gmra.mxu0 %v1656
    %v1865 = vpop.f32.mrf.mxu0
    %v1866 = vadd.f32 %v1698, %v1865
    %v1867 = vpop.f32.mrf.mxu0
    %v1868 = vadd.f32 %v1698, %v1867
    %1869 = vmatmul.bf16.gmra.mxu0 %v1658
    %v1870 = vpop.f32.mrf.mxu0
    %v1871 = vadd.f32 %v1698, %v1870
    %v1872 = vpop.f32.mrf.mxu0
    %v1873 = vadd.f32 %v1698, %v1872
    %1874 = vmatmul.bf16.gmra.mxu0 %v1660
    %v1875 = vpop.f32.mrf.mxu0
    %v1876 = vadd.f32 %v1698, %v1875
    %v1877 = vpop.f32.mrf.mxu0
    %v1878 = vadd.f32 %v1698, %v1877
    %1879 = vmatmul.bf16.gmra.mxu0 %v1662
    %v1880 = vpop.f32.mrf.mxu0
    %v1881 = vadd.f32 %v1698, %v1880
    %v1882 = vpop.f32.mrf.mxu0
    %v1883 = vadd.f32 %v1698, %v1882
    %1884 = vdwg.mxu0
    %1885 = vmatpush.bf16.msra.mxu0 %v1779
    %1886 = vmatpush.bf16.msra.mxu0 %v1778
    %1887 = vmatpush.bf16.msra.mxu0 %v1777
    %1888 = vmatpush.bf16.msra.mxu0 %v1776
    %1889 = vmatpush.bf16.msra.mxu0 %v1775
    %1890 = vmatpush.bf16.msra.mxu0 %v1774
    %1891 = vmatpush.bf16.msra.mxu0 %v1773
    %1892 = vmatpush.bf16.msra.mxu0 %v1772
    %1893 = vmatmul.bf16.gmra.mxu0 %v1633
    %v1894 = vpop.f32.mrf.mxu0
    %v1895 = vadd.f32 %v1806, %v1894
    %v1896 = vpop.f32.mrf.mxu0
    %v1897 = vadd.f32 %v1808, %v1896
    %1898 = vmatmul.bf16.gmra.mxu0 %v1635
    %v1899 = vpop.f32.mrf.mxu0
    %v1900 = vadd.f32 %v1811, %v1899
    %v1901 = vpop.f32.mrf.mxu0
    %v1902 = vadd.f32 %v1813, %v1901
    %1903 = vmatmul.bf16.gmra.mxu0 %v1637
    %v1904 = vpop.f32.mrf.mxu0
    %v1905 = vadd.f32 %v1816, %v1904
    %v1906 = vpop.f32.mrf.mxu0
    %v1907 = vadd.f32 %v1818, %v1906
    %1908 = vmatmul.bf16.gmra.mxu0 %v1639
    %v1909 = vpop.f32.mrf.mxu0
    %v1910 = vadd.f32 %v1821, %v1909
    %v1911 = vpop.f32.mrf.mxu0
    %v1912 = vadd.f32 %v1823, %v1911
    %1913 = vmatmul.bf16.gmra.mxu0 %v1641
    %v1914 = vpop.f32.mrf.mxu0
    %v1915 = vadd.f32 %v1826, %v1914
    %v1916 = vpop.f32.mrf.mxu0
    %v1917 = vadd.f32 %v1828, %v1916
    %1918 = vmatmul.bf16.gmra.mxu0 %v1643
    %v1919 = vpop.f32.mrf.mxu0
    %v1920 = vadd.f32 %v1831, %v1919
    %v1921 = vpop.f32.mrf.mxu0
    %v1922 = vadd.f32 %v1833, %v1921
    %1923 = vmatmul.bf16.gmra.mxu0 %v1645
    %v1924 = vpop.f32.mrf.mxu0
    %v1925 = vadd.f32 %v1836, %v1924
    %v1926 = vpop.f32.mrf.mxu0
    %v1927 = vadd.f32 %v1838, %v1926
    %1928 = vmatmul.bf16.gmra.mxu0 %v1647
    %v1929 = vpop.f32.mrf.mxu0
    %v1930 = vadd.f32 %v1841, %v1929
    %v1931 = vpop.f32.mrf.mxu0
    %v1932 = vadd.f32 %v1843, %v1931
    %1933 = vmatmul.bf16.gmra.mxu0 %v1649
    %v1934 = vpop.f32.mrf.mxu0
    %v1935 = vadd.f32 %v1846, %v1934
    %v1936 = vpop.f32.mrf.mxu0
    %v1937 = vadd.f32 %v1848, %v1936
    %1938 = vmatmul.bf16.gmra.mxu0 %v1651
    %v1939 = vpop.f32.mrf.mxu0
    %v1940 = vadd.f32 %v1851, %v1939
    %v1941 = vpop.f32.mrf.mxu0
    %v1942 = vadd.f32 %v1853, %v1941
    %1943 = vmatmul.bf16.gmra.mxu0 %v1653
    %v1944 = vpop.f32.mrf.mxu0
    %v1945 = vadd.f32 %v1856, %v1944
    %v1946 = vpop.f32.mrf.mxu0
    %v1947 = vadd.f32 %v1858, %v1946
    %1948 = vmatmul.bf16.gmra.mxu0 %v1655
    %v1949 = vpop.f32.mrf.mxu0
    %v1950 = vadd.f32 %v1861, %v1949
    %v1951 = vpop.f32.mrf.mxu0
    %v1952 = vadd.f32 %v1863, %v1951
    %1953 = vmatmul.bf16.gmra.mxu0 %v1657
    %v1954 = vpop.f32.mrf.mxu0
    %v1955 = vadd.f32 %v1866, %v1954
    %v1956 = vpop.f32.mrf.mxu0
    %v1957 = vadd.f32 %v1868, %v1956
    %1958 = vmatmul.bf16.gmra.mxu0 %v1659
    %v1959 = vpop.f32.mrf.mxu0
    %v1960 = vadd.f32 %v1871, %v1959
    %v1961 = vpop.f32.mrf.mxu0
    %v1962 = vadd.f32 %v1873, %v1961
    %1963 = vmatmul.bf16.gmra.mxu0 %v1661
    %v1964 = vpop.f32.mrf.mxu0
    %v1965 = vadd.f32 %v1876, %v1964
    %v1966 = vpop.f32.mrf.mxu0
    %v1967 = vadd.f32 %v1878, %v1966
    %1968 = vmatmul.bf16.gmra.mxu0 %v1663
    %v1969 = vpop.f32.mrf.mxu0
    %v1970 = vadd.f32 %v1881, %v1969
    %v1971 = vpop.f32.mrf.mxu0
    %v1972 = vadd.f32 %v1883, %v1971
    %1973 = vdwg.mxu0
    %v1974 = vsub.f32 0.0, %v1895
    %v1975 = vsub.f32 0.0, %v1897
    %v1976 = vsub.f32 0.0, %v1900
    %v1977 = vsub.f32 0.0, %v1902
    %v1978 = vsub.f32 0.0, %v1905
    %v1979 = vsub.f32 0.0, %v1907
    %v1980 = vsub.f32 0.0, %v1910
    %v1981 = vsub.f32 0.0, %v1912
    %v1982 = vsub.f32 0.0, %v1915
    %v1983 = vsub.f32 0.0, %v1917
    %v1984 = vsub.f32 0.0, %v1920
    %v1985 = vsub.f32 0.0, %v1922
    %v1986 = vsub.f32 0.0, %v1925
    %v1987 = vsub.f32 0.0, %v1927
    %v1988 = vsub.f32 0.0, %v1930
    %v1989 = vsub.f32 0.0, %v1932
    %v1990 = vsub.f32 0.0, %v1935
    %v1991 = vsub.f32 0.0, %v1937
    %v1992 = vsub.f32 0.0, %v1940
    %v1993 = vsub.f32 0.0, %v1942
    %v1994 = vsub.f32 0.0, %v1945
    %v1995 = vsub.f32 0.0, %v1947
    %v1996 = vsub.f32 0.0, %v1950
    %v1997 = vsub.f32 0.0, %v1952
    %v1998 = vsub.f32 0.0, %v1955
    %v1999 = vsub.f32 0.0, %v1957
    %v2000 = vsub.f32 0.0, %v1960
    %v2001 = vsub.f32 0.0, %v1962
    %v2002 = vsub.f32 0.0, %v1965
    %v2003 = vsub.f32 0.0, %v1967
    %v2004 = vsub.f32 0.0, %v1970
    %v2005 = vsub.f32 0.0, %v1972
    %v2006 = vmul.f32 %v1974, 1.442695
    %v2007 = vpow.pop %v2006
    %v2008 = vmul.f32 %v1975, 1.442695
    %v2009 = vpow.pop %v2008
    %v2010 = vmul.f32 %v1976, 1.442695
    %v2011 = vpow.pop %v2010
    %v2012 = vmul.f32 %v1977, 1.442695
    %v2013 = vpow.pop %v2012
    %v2014 = vmul.f32 %v1978, 1.442695
    %v2015 = vpow.pop %v2014
    %v2016 = vmul.f32 %v1979, 1.442695
    %v2017 = vpow.pop %v2016
    %v2018 = vmul.f32 %v1980, 1.442695
    %v2019 = vpow.pop %v2018
    %v2020 = vmul.f32 %v1981, 1.442695
    %v2021 = vpow.pop %v2020
    %v2022 = vmul.f32 %v1982, 1.442695
    %v2023 = vpow.pop %v2022
    %v2024 = vmul.f32 %v1983, 1.442695
    %v2025 = vpow.pop %v2024
    %v2026 = vmul.f32 %v1984, 1.442695
    %v2027 = vpow.pop %v2026
    %v2028 = vmul.f32 %v1985, 1.442695
    %v2029 = vpow.pop %v2028
    %v2030 = vmul.f32 %v1986, 1.442695
    %v2031 = vpow.pop %v2030
    %v2032 = vmul.f32 %v1987, 1.442695
    %v2033 = vpow.pop %v2032
    %v2034 = vmul.f32 %v1988, 1.442695
    %v2035 = vpow.pop %v2034
    %v2036 = vmul.f32 %v1989, 1.442695
    %v2037 = vpow.pop %v2036
    %v2038 = vmul.f32 %v1990, 1.442695
    %v2039 = vpow.pop %v2038
    %v2040 = vmul.f32 %v1991, 1.442695
    %v2041 = vpow.pop %v2040
    %v2042 = vmul.f32 %v1992, 1.442695
    %v2043 = vpow.pop %v2042
    %v2044 = vmul.f32 %v1993, 1.442695
    %v2045 = vpow.pop %v2044
    %v2046 = vmul.f32 %v1994, 1.442695
    %v2047 = vpow.pop %v2046
    %v2048 = vmul.f32 %v1995, 1.442695
    %v2049 = vpow.pop %v2048
    %v2050 = vmul.f32 %v1996, 1.442695
    %v2051 = vpow.pop %v2050
    %v2052 = vmul.f32 %v1997, 1.442695
    %v2053 = vpow.pop %v2052
    %v2054 = vmul.f32 %v1998, 1.442695
    %v2055 = vpow.pop %v2054
    %v2056 = vmul.f32 %v1999, 1.442695
    %v2057 = vpow.pop %v2056
    %v2058 = vmul.f32 %v2000, 1.442695
    %v2059 = vpow.pop %v2058
    %v2060 = vmul.f32 %v2001, 1.442695
    %v2061 = vpow.pop %v2060
    %v2062 = vmul.f32 %v2002, 1.442695
    %v2063 = vpow.pop %v2062
    %v2064 = vmul.f32 %v2003, 1.442695
    %v2065 = vpow.pop %v2064
    %v2066 = vmul.f32 %v2004, 1.442695
    %v2067 = vpow.pop %v2066
    %v2068 = vmul.f32 %v2005, 1.442695
    %v2069 = vpow.pop %v2068
    %v2070 = vadd.f32 %v2007, 1.0
    %v2071 = vadd.f32 %v2009, 1.0
    %v2072 = vadd.f32 %v2011, 1.0
    %v2073 = vadd.f32 %v2013, 1.0
    %v2074 = vadd.f32 %v2015, 1.0
    %v2075 = vadd.f32 %v2017, 1.0
    %v2076 = vadd.f32 %v2019, 1.0
    %v2077 = vadd.f32 %v2021, 1.0
    %v2078 = vadd.f32 %v2023, 1.0
    %v2079 = vadd.f32 %v2025, 1.0
    %v2080 = vadd.f32 %v2027, 1.0
    %v2081 = vadd.f32 %v2029, 1.0
    %v2082 = vadd.f32 %v2031, 1.0
    %v2083 = vadd.f32 %v2033, 1.0
    %v2084 = vadd.f32 %v2035, 1.0
    %v2085 = vadd.f32 %v2037, 1.0
    %v2086 = vadd.f32 %v2039, 1.0
    %v2087 = vadd.f32 %v2041, 1.0
    %v2088 = vadd.f32 %v2043, 1.0
    %v2089 = vadd.f32 %v2045, 1.0
    %v2090 = vadd.f32 %v2047, 1.0
    %v2091 = vadd.f32 %v2049, 1.0
    %v2092 = vadd.f32 %v2051, 1.0
    %v2093 = vadd.f32 %v2053, 1.0
    %v2094 = vadd.f32 %v2055, 1.0
    %v2095 = vadd.f32 %v2057, 1.0
    %v2096 = vadd.f32 %v2059, 1.0
    %v2097 = vadd.f32 %v2061, 1.0
    %v2098 = vadd.f32 %v2063, 1.0
    %v2099 = vadd.f32 %v2065, 1.0
    %v2100 = vadd.f32 %v2067, 1.0
    %v2101 = vadd.f32 %v2069, 1.0
    %v2102 = vrcp.pop %v2070
    %v2103 = vmul.f32 %v2070, %v2102
    %v2104 = vsub.f32 1.0, %v2103
    %v2105 = vmul.f32 %v2102, %v2104
    %v2106 = vadd.f32 %v2102, %v2105
    %vm2107 = vweird.f32 %v2070
    %vm2108 = vweird.f32 %v2102
    %vm2109 = vmor %vm2107, %vm2108
    %v2110 = vsel %vm2109, %v2102, %v2106
    %v2111 = vand.u32 2147483647, %v2070
    %vm2112 = vcmp.eq.f32.partialorder %v2111, 8.507059e+37
    %v2113 = vand.u32 %v2070, 2147483648
    %v2114 = vor.u32 1.1754944e-38, %v2113
    %v2115 = vsel %vm2112, %v2114, %v2110
    %v2116 = vmul.f32 1.0, %v2115
    %v2117 = vrcp.pop %v2071
    %v2118 = vmul.f32 %v2071, %v2117
    %v2119 = vsub.f32 1.0, %v2118
    %v2120 = vmul.f32 %v2117, %v2119
    %v2121 = vadd.f32 %v2117, %v2120
    %vm2122 = vweird.f32 %v2071
    %vm2123 = vweird.f32 %v2117
    %vm2124 = vmor %vm2122, %vm2123
    %v2125 = vsel %vm2124, %v2117, %v2121
    %v2126 = vand.u32 2147483647, %v2071
    %vm2127 = vcmp.eq.f32.partialorder %v2126, 8.507059e+37
    %v2128 = vand.u32 %v2071, 2147483648
    %v2129 = vor.u32 1.1754944e-38, %v2128
    %v2130 = vsel %vm2127, %v2129, %v2125
    %v2131 = vmul.f32 1.0, %v2130
    %v2132 = vrcp.pop %v2072
    %v2133 = vmul.f32 %v2072, %v2132
    %v2134 = vsub.f32 1.0, %v2133
    %v2135 = vmul.f32 %v2132, %v2134
    %v2136 = vadd.f32 %v2132, %v2135
    %vm2137 = vweird.f32 %v2072
    %vm2138 = vweird.f32 %v2132
    %vm2139 = vmor %vm2137, %vm2138
    %v2140 = vsel %vm2139, %v2132, %v2136
    %v2141 = vand.u32 2147483647, %v2072
    %vm2142 = vcmp.eq.f32.partialorder %v2141, 8.507059e+37
    %v2143 = vand.u32 %v2072, 2147483648
    %v2144 = vor.u32 1.1754944e-38, %v2143
    %v2145 = vsel %vm2142, %v2144, %v2140
    %v2146 = vmul.f32 1.0, %v2145
    %v2147 = vrcp.pop %v2073
    %v2148 = vmul.f32 %v2073, %v2147
    %v2149 = vsub.f32 1.0, %v2148
    %v2150 = vmul.f32 %v2147, %v2149
    %v2151 = vadd.f32 %v2147, %v2150
    %vm2152 = vweird.f32 %v2073
    %vm2153 = vweird.f32 %v2147
    %vm2154 = vmor %vm2152, %vm2153
    %v2155 = vsel %vm2154, %v2147, %v2151
    %v2156 = vand.u32 2147483647, %v2073
    %vm2157 = vcmp.eq.f32.partialorder %v2156, 8.507059e+37
    %v2158 = vand.u32 %v2073, 2147483648
    %v2159 = vor.u32 1.1754944e-38, %v2158
    %v2160 = vsel %vm2157, %v2159, %v2155
    %v2161 = vmul.f32 1.0, %v2160
    %v2162 = vrcp.pop %v2074
    %v2163 = vmul.f32 %v2074, %v2162
    %v2164 = vsub.f32 1.0, %v2163
    %v2165 = vmul.f32 %v2162, %v2164
    %v2166 = vadd.f32 %v2162, %v2165
    %vm2167 = vweird.f32 %v2074
    %vm2168 = vweird.f32 %v2162
    %vm2169 = vmor %vm2167, %vm2168
    %v2170 = vsel %vm2169, %v2162, %v2166
    %v2171 = vand.u32 2147483647, %v2074
    %vm2172 = vcmp.eq.f32.partialorder %v2171, 8.507059e+37
    %v2173 = vand.u32 %v2074, 2147483648
    %v2174 = vor.u32 1.1754944e-38, %v2173
    %v2175 = vsel %vm2172, %v2174, %v2170
    %v2176 = vmul.f32 1.0, %v2175
    %v2177 = vrcp.pop %v2075
    %v2178 = vmul.f32 %v2075, %v2177
    %v2179 = vsub.f32 1.0, %v2178
    %v2180 = vmul.f32 %v2177, %v2179
    %v2181 = vadd.f32 %v2177, %v2180
    %vm2182 = vweird.f32 %v2075
    %vm2183 = vweird.f32 %v2177
    %vm2184 = vmor %vm2182, %vm2183
    %v2185 = vsel %vm2184, %v2177, %v2181
    %v2186 = vand.u32 2147483647, %v2075
    %vm2187 = vcmp.eq.f32.partialorder %v2186, 8.507059e+37
    %v2188 = vand.u32 %v2075, 2147483648
    %v2189 = vor.u32 1.1754944e-38, %v2188
    %v2190 = vsel %vm2187, %v2189, %v2185
    %v2191 = vmul.f32 1.0, %v2190
    %v2192 = vrcp.pop %v2076
    %v2193 = vmul.f32 %v2076, %v2192
    %v2194 = vsub.f32 1.0, %v2193
    %v2195 = vmul.f32 %v2192, %v2194
    %v2196 = vadd.f32 %v2192, %v2195
    %vm2197 = vweird.f32 %v2076
    %vm2198 = vweird.f32 %v2192
    %vm2199 = vmor %vm2197, %vm2198
    %v2200 = vsel %vm2199, %v2192, %v2196
    %v2201 = vand.u32 2147483647, %v2076
    %vm2202 = vcmp.eq.f32.partialorder %v2201, 8.507059e+37
    %v2203 = vand.u32 %v2076, 2147483648
    %v2204 = vor.u32 1.1754944e-38, %v2203
    %v2205 = vsel %vm2202, %v2204, %v2200
    %v2206 = vmul.f32 1.0, %v2205
    %v2207 = vrcp.pop %v2077
    %v2208 = vmul.f32 %v2077, %v2207
    %v2209 = vsub.f32 1.0, %v2208
    %v2210 = vmul.f32 %v2207, %v2209
    %v2211 = vadd.f32 %v2207, %v2210
    %vm2212 = vweird.f32 %v2077
    %vm2213 = vweird.f32 %v2207
    %vm2214 = vmor %vm2212, %vm2213
    %v2215 = vsel %vm2214, %v2207, %v2211
    %v2216 = vand.u32 2147483647, %v2077
    %vm2217 = vcmp.eq.f32.partialorder %v2216, 8.507059e+37
    %v2218 = vand.u32 %v2077, 2147483648
    %v2219 = vor.u32 1.1754944e-38, %v2218
    %v2220 = vsel %vm2217, %v2219, %v2215
    %v2221 = vmul.f32 1.0, %v2220
    %v2222 = vrcp.pop %v2078
    %v2223 = vmul.f32 %v2078, %v2222
    %v2224 = vsub.f32 1.0, %v2223
    %v2225 = vmul.f32 %v2222, %v2224
    %v2226 = vadd.f32 %v2222, %v2225
    %vm2227 = vweird.f32 %v2078
    %vm2228 = vweird.f32 %v2222
    %vm2229 = vmor %vm2227, %vm2228
    %v2230 = vsel %vm2229, %v2222, %v2226
    %v2231 = vand.u32 2147483647, %v2078
    %vm2232 = vcmp.eq.f32.partialorder %v2231, 8.507059e+37
    %v2233 = vand.u32 %v2078, 2147483648
    %v2234 = vor.u32 1.1754944e-38, %v2233
    %v2235 = vsel %vm2232, %v2234, %v2230
    %v2236 = vmul.f32 1.0, %v2235
    %v2237 = vrcp.pop %v2079
    %v2238 = vmul.f32 %v2079, %v2237
    %v2239 = vsub.f32 1.0, %v2238
    %v2240 = vmul.f32 %v2237, %v2239
    %v2241 = vadd.f32 %v2237, %v2240
    %vm2242 = vweird.f32 %v2079
    %vm2243 = vweird.f32 %v2237
    %vm2244 = vmor %vm2242, %vm2243
    %v2245 = vsel %vm2244, %v2237, %v2241
    %v2246 = vand.u32 2147483647, %v2079
    %vm2247 = vcmp.eq.f32.partialorder %v2246, 8.507059e+37
    %v2248 = vand.u32 %v2079, 2147483648
    %v2249 = vor.u32 1.1754944e-38, %v2248
    %v2250 = vsel %vm2247, %v2249, %v2245
    %v2251 = vmul.f32 1.0, %v2250
    %v2252 = vrcp.pop %v2080
    %v2253 = vmul.f32 %v2080, %v2252
    %v2254 = vsub.f32 1.0, %v2253
    %v2255 = vmul.f32 %v2252, %v2254
    %v2256 = vadd.f32 %v2252, %v2255
    %vm2257 = vweird.f32 %v2080
    %vm2258 = vweird.f32 %v2252
    %vm2259 = vmor %vm2257, %vm2258
    %v2260 = vsel %vm2259, %v2252, %v2256
    %v2261 = vand.u32 2147483647, %v2080
    %vm2262 = vcmp.eq.f32.partialorder %v2261, 8.507059e+37
    %v2263 = vand.u32 %v2080, 2147483648
    %v2264 = vor.u32 1.1754944e-38, %v2263
    %v2265 = vsel %vm2262, %v2264, %v2260
    %v2266 = vmul.f32 1.0, %v2265
    %v2267 = vrcp.pop %v2081
    %v2268 = vmul.f32 %v2081, %v2267
    %v2269 = vsub.f32 1.0, %v2268
    %v2270 = vmul.f32 %v2267, %v2269
    %v2271 = vadd.f32 %v2267, %v2270
    %vm2272 = vweird.f32 %v2081
    %vm2273 = vweird.f32 %v2267
    %vm2274 = vmor %vm2272, %vm2273
    %v2275 = vsel %vm2274, %v2267, %v2271
    %v2276 = vand.u32 2147483647, %v2081
    %vm2277 = vcmp.eq.f32.partialorder %v2276, 8.507059e+37
    %v2278 = vand.u32 %v2081, 2147483648
    %v2279 = vor.u32 1.1754944e-38, %v2278
    %v2280 = vsel %vm2277, %v2279, %v2275
    %v2281 = vmul.f32 1.0, %v2280
    %v2282 = vrcp.pop %v2082
    %v2283 = vmul.f32 %v2082, %v2282
    %v2284 = vsub.f32 1.0, %v2283
    %v2285 = vmul.f32 %v2282, %v2284
    %v2286 = vadd.f32 %v2282, %v2285
    %vm2287 = vweird.f32 %v2082
    %vm2288 = vweird.f32 %v2282
    %vm2289 = vmor %vm2287, %vm2288
    %v2290 = vsel %vm2289, %v2282, %v2286
    %v2291 = vand.u32 2147483647, %v2082
    %vm2292 = vcmp.eq.f32.partialorder %v2291, 8.507059e+37
    %v2293 = vand.u32 %v2082, 2147483648
    %v2294 = vor.u32 1.1754944e-38, %v2293
    %v2295 = vsel %vm2292, %v2294, %v2290
    %v2296 = vmul.f32 1.0, %v2295
    %v2297 = vrcp.pop %v2083
    %v2298 = vmul.f32 %v2083, %v2297
    %v2299 = vsub.f32 1.0, %v2298
    %v2300 = vmul.f32 %v2297, %v2299
    %v2301 = vadd.f32 %v2297, %v2300
    %vm2302 = vweird.f32 %v2083
    %vm2303 = vweird.f32 %v2297
    %vm2304 = vmor %vm2302, %vm2303
    %v2305 = vsel %vm2304, %v2297, %v2301
    %v2306 = vand.u32 2147483647, %v2083
    %vm2307 = vcmp.eq.f32.partialorder %v2306, 8.507059e+37
    %v2308 = vand.u32 %v2083, 2147483648
    %v2309 = vor.u32 1.1754944e-38, %v2308
    %v2310 = vsel %vm2307, %v2309, %v2305
    %v2311 = vmul.f32 1.0, %v2310
    %v2312 = vrcp.pop %v2084
    %v2313 = vmul.f32 %v2084, %v2312
    %v2314 = vsub.f32 1.0, %v2313
    %v2315 = vmul.f32 %v2312, %v2314
    %v2316 = vadd.f32 %v2312, %v2315
    %vm2317 = vweird.f32 %v2084
    %vm2318 = vweird.f32 %v2312
    %vm2319 = vmor %vm2317, %vm2318
    %v2320 = vsel %vm2319, %v2312, %v2316
    %v2321 = vand.u32 2147483647, %v2084
    %vm2322 = vcmp.eq.f32.partialorder %v2321, 8.507059e+37
    %v2323 = vand.u32 %v2084, 2147483648
    %v2324 = vor.u32 1.1754944e-38, %v2323
    %v2325 = vsel %vm2322, %v2324, %v2320
    %v2326 = vmul.f32 1.0, %v2325
    %v2327 = vrcp.pop %v2085
    %v2328 = vmul.f32 %v2085, %v2327
    %v2329 = vsub.f32 1.0, %v2328
    %v2330 = vmul.f32 %v2327, %v2329
    %v2331 = vadd.f32 %v2327, %v2330
    %vm2332 = vweird.f32 %v2085
    %vm2333 = vweird.f32 %v2327
    %vm2334 = vmor %vm2332, %vm2333
    %v2335 = vsel %vm2334, %v2327, %v2331
    %v2336 = vand.u32 2147483647, %v2085
    %vm2337 = vcmp.eq.f32.partialorder %v2336, 8.507059e+37
    %v2338 = vand.u32 %v2085, 2147483648
    %v2339 = vor.u32 1.1754944e-38, %v2338
    %v2340 = vsel %vm2337, %v2339, %v2335
    %v2341 = vmul.f32 1.0, %v2340
    %v2342 = vrcp.pop %v2086
    %v2343 = vmul.f32 %v2086, %v2342
    %v2344 = vsub.f32 1.0, %v2343
    %v2345 = vmul.f32 %v2342, %v2344
    %v2346 = vadd.f32 %v2342, %v2345
    %vm2347 = vweird.f32 %v2086
    %vm2348 = vweird.f32 %v2342
    %vm2349 = vmor %vm2347, %vm2348
    %v2350 = vsel %vm2349, %v2342, %v2346
    %v2351 = vand.u32 2147483647, %v2086
    %vm2352 = vcmp.eq.f32.partialorder %v2351, 8.507059e+37
    %v2353 = vand.u32 %v2086, 2147483648
    %v2354 = vor.u32 1.1754944e-38, %v2353
    %v2355 = vsel %vm2352, %v2354, %v2350
    %v2356 = vmul.f32 1.0, %v2355
    %v2357 = vrcp.pop %v2087
    %v2358 = vmul.f32 %v2087, %v2357
    %v2359 = vsub.f32 1.0, %v2358
    %v2360 = vmul.f32 %v2357, %v2359
    %v2361 = vadd.f32 %v2357, %v2360
    %vm2362 = vweird.f32 %v2087
    %vm2363 = vweird.f32 %v2357
    %vm2364 = vmor %vm2362, %vm2363
    %v2365 = vsel %vm2364, %v2357, %v2361
    %v2366 = vand.u32 2147483647, %v2087
    %vm2367 = vcmp.eq.f32.partialorder %v2366, 8.507059e+37
    %v2368 = vand.u32 %v2087, 2147483648
    %v2369 = vor.u32 1.1754944e-38, %v2368
    %v2370 = vsel %vm2367, %v2369, %v2365
    %v2371 = vmul.f32 1.0, %v2370
    %v2372 = vrcp.pop %v2088
    %v2373 = vmul.f32 %v2088, %v2372
    %v2374 = vsub.f32 1.0, %v2373
    %v2375 = vmul.f32 %v2372, %v2374
    %v2376 = vadd.f32 %v2372, %v2375
    %vm2377 = vweird.f32 %v2088
    %vm2378 = vweird.f32 %v2372
    %vm2379 = vmor %vm2377, %vm2378
    %v2380 = vsel %vm2379, %v2372, %v2376
    %v2381 = vand.u32 2147483647, %v2088
    %vm2382 = vcmp.eq.f32.partialorder %v2381, 8.507059e+37
    %v2383 = vand.u32 %v2088, 2147483648
    %v2384 = vor.u32 1.1754944e-38, %v2383
    %v2385 = vsel %vm2382, %v2384, %v2380
    %v2386 = vmul.f32 1.0, %v2385
    %v2387 = vrcp.pop %v2089
    %v2388 = vmul.f32 %v2089, %v2387
    %v2389 = vsub.f32 1.0, %v2388
    %v2390 = vmul.f32 %v2387, %v2389
    %v2391 = vadd.f32 %v2387, %v2390
    %vm2392 = vweird.f32 %v2089
    %vm2393 = vweird.f32 %v2387
    %vm2394 = vmor %vm2392, %vm2393
    %v2395 = vsel %vm2394, %v2387, %v2391
    %v2396 = vand.u32 2147483647, %v2089
    %vm2397 = vcmp.eq.f32.partialorder %v2396, 8.507059e+37
    %v2398 = vand.u32 %v2089, 2147483648
    %v2399 = vor.u32 1.1754944e-38, %v2398
    %v2400 = vsel %vm2397, %v2399, %v2395
    %v2401 = vmul.f32 1.0, %v2400
    %v2402 = vrcp.pop %v2090
    %v2403 = vmul.f32 %v2090, %v2402
    %v2404 = vsub.f32 1.0, %v2403
    %v2405 = vmul.f32 %v2402, %v2404
    %v2406 = vadd.f32 %v2402, %v2405
    %vm2407 = vweird.f32 %v2090
    %vm2408 = vweird.f32 %v2402
    %vm2409 = vmor %vm2407, %vm2408
    %v2410 = vsel %vm2409, %v2402, %v2406
    %v2411 = vand.u32 2147483647, %v2090
    %vm2412 = vcmp.eq.f32.partialorder %v2411, 8.507059e+37
    %v2413 = vand.u32 %v2090, 2147483648
    %v2414 = vor.u32 1.1754944e-38, %v2413
    %v2415 = vsel %vm2412, %v2414, %v2410
    %v2416 = vmul.f32 1.0, %v2415
    %v2417 = vrcp.pop %v2091
    %v2418 = vmul.f32 %v2091, %v2417
    %v2419 = vsub.f32 1.0, %v2418
    %v2420 = vmul.f32 %v2417, %v2419
    %v2421 = vadd.f32 %v2417, %v2420
    %vm2422 = vweird.f32 %v2091
    %vm2423 = vweird.f32 %v2417
    %vm2424 = vmor %vm2422, %vm2423
    %v2425 = vsel %vm2424, %v2417, %v2421
    %v2426 = vand.u32 2147483647, %v2091
    %vm2427 = vcmp.eq.f32.partialorder %v2426, 8.507059e+37
    %v2428 = vand.u32 %v2091, 2147483648
    %v2429 = vor.u32 1.1754944e-38, %v2428
    %v2430 = vsel %vm2427, %v2429, %v2425
    %v2431 = vmul.f32 1.0, %v2430
    %v2432 = vrcp.pop %v2092
    %v2433 = vmul.f32 %v2092, %v2432
    %v2434 = vsub.f32 1.0, %v2433
    %v2435 = vmul.f32 %v2432, %v2434
    %v2436 = vadd.f32 %v2432, %v2435
    %vm2437 = vweird.f32 %v2092
    %vm2438 = vweird.f32 %v2432
    %vm2439 = vmor %vm2437, %vm2438
    %v2440 = vsel %vm2439, %v2432, %v2436
    %v2441 = vand.u32 2147483647, %v2092
    %vm2442 = vcmp.eq.f32.partialorder %v2441, 8.507059e+37
    %v2443 = vand.u32 %v2092, 2147483648
    %v2444 = vor.u32 1.1754944e-38, %v2443
    %v2445 = vsel %vm2442, %v2444, %v2440
    %v2446 = vmul.f32 1.0, %v2445
    %v2447 = vrcp.pop %v2093
    %v2448 = vmul.f32 %v2093, %v2447
    %v2449 = vsub.f32 1.0, %v2448
    %v2450 = vmul.f32 %v2447, %v2449
    %v2451 = vadd.f32 %v2447, %v2450
    %vm2452 = vweird.f32 %v2093
    %vm2453 = vweird.f32 %v2447
    %vm2454 = vmor %vm2452, %vm2453
    %v2455 = vsel %vm2454, %v2447, %v2451
    %v2456 = vand.u32 2147483647, %v2093
    %vm2457 = vcmp.eq.f32.partialorder %v2456, 8.507059e+37
    %v2458 = vand.u32 %v2093, 2147483648
    %v2459 = vor.u32 1.1754944e-38, %v2458
    %v2460 = vsel %vm2457, %v2459, %v2455
    %v2461 = vmul.f32 1.0, %v2460
    %v2462 = vrcp.pop %v2094
    %v2463 = vmul.f32 %v2094, %v2462
    %v2464 = vsub.f32 1.0, %v2463
    %v2465 = vmul.f32 %v2462, %v2464
    %v2466 = vadd.f32 %v2462, %v2465
    %vm2467 = vweird.f32 %v2094
    %vm2468 = vweird.f32 %v2462
    %vm2469 = vmor %vm2467, %vm2468
    %v2470 = vsel %vm2469, %v2462, %v2466
    %v2471 = vand.u32 2147483647, %v2094
    %vm2472 = vcmp.eq.f32.partialorder %v2471, 8.507059e+37
    %v2473 = vand.u32 %v2094, 2147483648
    %v2474 = vor.u32 1.1754944e-38, %v2473
    %v2475 = vsel %vm2472, %v2474, %v2470
    %v2476 = vmul.f32 1.0, %v2475
    %v2477 = vrcp.pop %v2095
    %v2478 = vmul.f32 %v2095, %v2477
    %v2479 = vsub.f32 1.0, %v2478
    %v2480 = vmul.f32 %v2477, %v2479
    %v2481 = vadd.f32 %v2477, %v2480
    %vm2482 = vweird.f32 %v2095
    %vm2483 = vweird.f32 %v2477
    %vm2484 = vmor %vm2482, %vm2483
    %v2485 = vsel %vm2484, %v2477, %v2481
    %v2486 = vand.u32 2147483647, %v2095
    %vm2487 = vcmp.eq.f32.partialorder %v2486, 8.507059e+37
    %v2488 = vand.u32 %v2095, 2147483648
    %v2489 = vor.u32 1.1754944e-38, %v2488
    %v2490 = vsel %vm2487, %v2489, %v2485
    %v2491 = vmul.f32 1.0, %v2490
    %v2492 = vrcp.pop %v2096
    %v2493 = vmul.f32 %v2096, %v2492
    %v2494 = vsub.f32 1.0, %v2493
    %v2495 = vmul.f32 %v2492, %v2494
    %v2496 = vadd.f32 %v2492, %v2495
    %vm2497 = vweird.f32 %v2096
    %vm2498 = vweird.f32 %v2492
    %vm2499 = vmor %vm2497, %vm2498
    %v2500 = vsel %vm2499, %v2492, %v2496
    %v2501 = vand.u32 2147483647, %v2096
    %vm2502 = vcmp.eq.f32.partialorder %v2501, 8.507059e+37
    %v2503 = vand.u32 %v2096, 2147483648
    %v2504 = vor.u32 1.1754944e-38, %v2503
    %v2505 = vsel %vm2502, %v2504, %v2500
    %v2506 = vmul.f32 1.0, %v2505
    %v2507 = vrcp.pop %v2097
    %v2508 = vmul.f32 %v2097, %v2507
    %v2509 = vsub.f32 1.0, %v2508
    %v2510 = vmul.f32 %v2507, %v2509
    %v2511 = vadd.f32 %v2507, %v2510
    %vm2512 = vweird.f32 %v2097
    %vm2513 = vweird.f32 %v2507
    %vm2514 = vmor %vm2512, %vm2513
    %v2515 = vsel %vm2514, %v2507, %v2511
    %v2516 = vand.u32 2147483647, %v2097
    %vm2517 = vcmp.eq.f32.partialorder %v2516, 8.507059e+37
    %v2518 = vand.u32 %v2097, 2147483648
    %v2519 = vor.u32 1.1754944e-38, %v2518
    %v2520 = vsel %vm2517, %v2519, %v2515
    %v2521 = vmul.f32 1.0, %v2520
    %v2522 = vrcp.pop %v2098
    %v2523 = vmul.f32 %v2098, %v2522
    %v2524 = vsub.f32 1.0, %v2523
    %v2525 = vmul.f32 %v2522, %v2524
    %v2526 = vadd.f32 %v2522, %v2525
    %vm2527 = vweird.f32 %v2098
    %vm2528 = vweird.f32 %v2522
    %vm2529 = vmor %vm2527, %vm2528
    %v2530 = vsel %vm2529, %v2522, %v2526
    %v2531 = vand.u32 2147483647, %v2098
    %vm2532 = vcmp.eq.f32.partialorder %v2531, 8.507059e+37
    %v2533 = vand.u32 %v2098, 2147483648
    %v2534 = vor.u32 1.1754944e-38, %v2533
    %v2535 = vsel %vm2532, %v2534, %v2530
    %v2536 = vmul.f32 1.0, %v2535
    %v2537 = vrcp.pop %v2099
    %v2538 = vmul.f32 %v2099, %v2537
    %v2539 = vsub.f32 1.0, %v2538
    %v2540 = vmul.f32 %v2537, %v2539
    %v2541 = vadd.f32 %v2537, %v2540
    %vm2542 = vweird.f32 %v2099
    %vm2543 = vweird.f32 %v2537
    %vm2544 = vmor %vm2542, %vm2543
    %v2545 = vsel %vm2544, %v2537, %v2541
    %v2546 = vand.u32 2147483647, %v2099
    %vm2547 = vcmp.eq.f32.partialorder %v2546, 8.507059e+37
    %v2548 = vand.u32 %v2099, 2147483648
    %v2549 = vor.u32 1.1754944e-38, %v2548
    %v2550 = vsel %vm2547, %v2549, %v2545
    %v2551 = vmul.f32 1.0, %v2550
    %v2552 = vrcp.pop %v2100
    %v2553 = vmul.f32 %v2100, %v2552
    %v2554 = vsub.f32 1.0, %v2553
    %v2555 = vmul.f32 %v2552, %v2554
    %v2556 = vadd.f32 %v2552, %v2555
    %vm2557 = vweird.f32 %v2100
    %vm2558 = vweird.f32 %v2552
    %vm2559 = vmor %vm2557, %vm2558
    %v2560 = vsel %vm2559, %v2552, %v2556
    %v2561 = vand.u32 2147483647, %v2100
    %vm2562 = vcmp.eq.f32.partialorder %v2561, 8.507059e+37
    %v2563 = vand.u32 %v2100, 2147483648
    %v2564 = vor.u32 1.1754944e-38, %v2563
    %v2565 = vsel %vm2562, %v2564, %v2560
    %v2566 = vmul.f32 1.0, %v2565
    %v2567 = vrcp.pop %v2101
    %v2568 = vmul.f32 %v2101, %v2567
    %v2569 = vsub.f32 1.0, %v2568
    %v2570 = vmul.f32 %v2567, %v2569
    %v2571 = vadd.f32 %v2567, %v2570
    %vm2572 = vweird.f32 %v2101
    %vm2573 = vweird.f32 %v2567
    %vm2574 = vmor %vm2572, %vm2573
    %v2575 = vsel %vm2574, %v2567, %v2571
    %v2576 = vand.u32 2147483647, %v2101
    %vm2577 = vcmp.eq.f32.partialorder %v2576, 8.507059e+37
    %v2578 = vand.u32 %v2101, 2147483648
    %v2579 = vor.u32 1.1754944e-38, %v2578
    %v2580 = vsel %vm2577, %v2579, %v2575
    %v2581 = vmul.f32 1.0, %v2580
    %2582 = vst [vmem:[#allocation10] sm:$0xff] %v2116
    %2583 = vst [vmem:[#allocation10 + $0x8] sm:$0xff] %v2131
    %2584 = vst [vmem:[#allocation10 + $0x10] sm:$0xff] %v2146
    %2585 = vst [vmem:[#allocation10 + $0x18] sm:$0xff] %v2161
    %2586 = vst [vmem:[#allocation10 + $0x20] sm:$0xff] %v2176
    %2587 = vst [vmem:[#allocation10 + $0x28] sm:$0xff] %v2191
    %2588 = vst [vmem:[#allocation10 + $0x30] sm:$0xff] %v2206
    %2589 = vst [vmem:[#allocation10 + $0x38] sm:$0xff] %v2221
    %2590 = vst [vmem:[#allocation10 + $0x40] sm:$0xff] %v2236
    %2591 = vst [vmem:[#allocation10 + $0x48] sm:$0xff] %v2251
    %2592 = vst [vmem:[#allocation10 + $0x50] sm:$0xff] %v2266
    %2593 = vst [vmem:[#allocation10 + $0x58] sm:$0xff] %v2281
    %2594 = vst [vmem:[#allocation10 + $0x60] sm:$0xff] %v2296
    %2595 = vst [vmem:[#allocation10 + $0x68] sm:$0xff] %v2311
    %2596 = vst [vmem:[#allocation10 + $0x70] sm:$0xff] %v2326
    %2597 = vst [vmem:[#allocation10 + $0x78] sm:$0xff] %v2341
    %2598 = vst [vmem:[#allocation10 + $0x80] sm:$0xff] %v2356
    %2599 = vst [vmem:[#allocation10 + $0x88] sm:$0xff] %v2371
    %2600 = vst [vmem:[#allocation10 + $0x90] sm:$0xff] %v2386
    %2601 = vst [vmem:[#allocation10 + $0x98] sm:$0xff] %v2401
    %2602 = vst [vmem:[#allocation10 + $0xa0] sm:$0xff] %v2416
    %2603 = vst [vmem:[#allocation10 + $0xa8] sm:$0xff] %v2431
    %2604 = vst [vmem:[#allocation10 + $0xb0] sm:$0xff] %v2446
    %2605 = vst [vmem:[#allocation10 + $0xb8] sm:$0xff] %v2461
    %2606 = vst [vmem:[#allocation10 + $0xc0] sm:$0xff] %v2476
    %2607 = vst [vmem:[#allocation10 + $0xc8] sm:$0xff] %v2491
    %2608 = vst [vmem:[#allocation10 + $0xd0] sm:$0xff] %v2506
    %2609 = vst [vmem:[#allocation10 + $0xd8] sm:$0xff] %v2521
    %2610 = vst [vmem:[#allocation10 + $0xe0] sm:$0xff] %v2536
    %2611 = vst [vmem:[#allocation10 + $0xe8] sm:$0xff] %v2551
    %2612 = vst [vmem:[#allocation10 + $0xf0] sm:$0xff] %v2566
    %2613 = vst [vmem:[#allocation10 + $0xf8] sm:$0xff] %v2581
    // Predicated region
    $region38: #{tpu_custom_call.1} parent=1 // pred_check
      _
    $region39: #{tpu_custom_call.1} parent=1 // pred_check_branch
      %2615 = sbr.rel (0) target = $region41
    $region40: #{tpu_custom_call.1} parent=1 // pred_region
      %2617 = vsyncadd [#allocation4], 0
      %s2618 = sshll.u32 [#allocation10], 4
      %s2619 = int_to_ptr.vmem [resolvable:$true] %s2618
      %s2620 = sshll.u32 %s5, 4
      %s2621 = int_to_ptr.hbm [resolvable:$true] %s2620
      %2626 = dma.vmem_to_hbm [thread:$0]  %s2619, 4096, %s2621, [#allocation4], 128, 128, 8
    $region41: #{tpu_custom_call.1} parent=1 // pred_fallthru
      _
    // Predicated region
    $region42: #{tpu_custom_call.1} parent=1 // pred_check
      _
    $region43: #{tpu_custom_call.1} parent=1 // pred_check_branch
      %2628 = sbr.rel (0) target = $region45
    $region44: #{tpu_custom_call.1} parent=1 // pred_region
      %2630 = dma.done [#allocation4], 4096
    $region45: #{tpu_custom_call.1} parent=1 // pred_fallthru
      _
    %2631 = vsyncpa [#allocation3], 1
    %2632 = vsyncpa [#allocation6], 1
    %2633 = vsyncpa [#allocation9], 1
    %2634 = vsyncpa [#allocation4], 1

</llo_original>
